<compile_context>
chip_gen: v7x
topology: tpu7x:2x2x1
jax: 0.10.0
libtpu: 0.0.40
codegen_flags: <defaults>
</compile_context>

<pallas_src>
import jax
import jax.numpy as jnp
from jax.experimental import pallas as pl
from jax.experimental.pallas import tpu as pltpu

EPS = 1e-5
LANE = 128
SUB = 8


def _rup(x, m):
    return (x + m - 1) // m * m


def _row_tile(rows, cap=512):
    """Row-tile size (multiple of 8, <= cap); rows get padded to a multiple of it."""
    return min(cap, _rup(rows, SUB))


def _k_tile(kp, cap=512):
    """Largest multiple of 128 that divides kp (kp is a multiple of 128), <= cap."""
    tk = min(kp, cap)
    while kp % tk:
        tk -= LANE
    return tk


# ---------------------------------------------------------------------------
# Conv-as-packed-matmul + fused BN partial statistics
# ---------------------------------------------------------------------------
def _conv_bn_kernel(a_ref, w_ref, y_ref, s_ref, q_ref, acc_ref):
    k = pl.program_id(1)

    @pl.when(k == 0)
    def _():
        acc_ref[...] = jnp.zeros_like(acc_ref)

    # bf16 operands, f32 accumulation into a VMEM scratch (caps vreg pressure,
    # lets Mosaic use MXU-side accumulation).
    acc_ref[...] += jnp.dot(a_ref[...], w_ref[...],
                            preferred_element_type=jnp.float32)

    @pl.when(k == pl.num_programs(1) - 1)
    def _():
        acc = acc_ref[...]
        y_ref[...] = acc.astype(y_ref.dtype)
        # Per-row-tile partial BN statistics straight from the f32 accumulator
        # (padded rows are all-zero inputs -> contribute 0; no masking needed).
        s_ref[...] = jnp.sum(acc, axis=0, keepdims=True)
        q_ref[...] = jnp.sum(acc * acc, axis=0, keepdims=True)


def conv_bn_stats(a, w, *, tm):
    """y = a @ w  (bf16 in, f32 accumulate, bf16 out) plus per-row-tile
    partial sum / sum-of-squares of y.

    a: (Mp, Kp) bf16 packed-tap patches, Mp % tm == 0, Kp % 128 == 0.
    w: (Kp, Nc) bf16, Nc % 128 == 0.
    """
    Mp, Kp = a.shape
    Kp2, Nc = w.shape
    assert Kp == Kp2 and Mp % tm == 0 and Kp % LANE == 0 and Nc % LANE == 0
    tk = _k_tile(Kp)
    grid = (Mp // tm, Kp // tk)

    y, s, q = pl.pallas_call(
        _conv_bn_kernel,
        out_shape=(jax.ShapeDtypeStruct((Mp, Nc), jnp.bfloat16),
                   jax.ShapeDtypeStruct((grid[0], 1, Nc), jnp.float32),
                   jax.ShapeDtypeStruct((grid[0], 1, Nc), jnp.float32)),
        grid_spec=pltpu.PrefetchScalarGridSpec(
            num_scalar_prefetch=0,
            grid=grid,
            in_specs=[
                pl.BlockSpec((tm, tk), lambda i, k: (i, k)),
                # Weight block index is constant when Kp == tk, so Pallas does
                # not re-DMA it across row tiles (single resident copy + one
                # pipeline buffer; small enough on every generation).
                pl.BlockSpec((tk, Nc), lambda i, k: (k, 0)),
            ],
            out_specs=(
                pl.BlockSpec((tm, Nc), lambda i, k: (i, 0)),
                pl.BlockSpec((None, 1, Nc), lambda i, k: (i, 0, 0)),
                pl.BlockSpec((None, 1, Nc), lambda i, k: (i, 0, 0)),
            ),
            scratch_shapes=[pltpu.VMEM((tm, Nc), jnp.float32)]),
        compiler_params=pltpu.CompilerParams(
            dimension_semantics=("parallel", "arbitrary"),
            vmem_limit_bytes=32 * 1024 * 1024),
    )(a, w)
    return y, s, q


# ---------------------------------------------------------------------------
# Fused BN-apply epilogues (lane-dense tiles; lane_block selects a 128-wide
# column group of the source so the fused conv1|shortcut output never needs an
# XLA split copy).
# ---------------------------------------------------------------------------
def _bn_relu_kernel(y_ref, sc_ref, sh_ref, o_ref):
    y = y_ref[...].astype(jnp.float32)
    o_ref[...] = jnp.maximum(y * sc_ref[...] + sh_ref[...], 0.0).astype(o_ref.dtype)


def bn_relu(y_src, lane_block, scale, shift, *, tm, cout_p, out_dtype=jnp.bfloat16):
    Mp = y_src.shape[0]
    assert Mp % tm == 0
    return pl.pallas_call(
        _bn_relu_kernel,
        out_shape=jax.ShapeDtypeStruct((Mp, cout_p), out_dtype),
        grid_spec=pltpu.PrefetchScalarGridSpec(
            num_scalar_prefetch=0, grid=(Mp // tm,),
            in_specs=[pl.BlockSpec((tm, cout_p), lambda i: (i, lane_block)),
                      pl.BlockSpec((1, cout_p), lambda i: (0, 0)),
                      pl.BlockSpec((1, cout_p), lambda i: (0, 0))],
            out_specs=pl.BlockSpec((tm, cout_p), lambda i: (i, 0))),
        compiler_params=pltpu.CompilerParams(
            dimension_semantics=("parallel",)),
    )(y_src, scale.reshape(1, cout_p), shift.reshape(1, cout_p))


def _bn_add_relu_kernel(y_ref, sc1_ref, sh1_ref, r_ref, sc2_ref, sh2_ref, o_ref):
    main = y_ref[...].astype(jnp.float32) * sc1_ref[...] + sh1_ref[...]
    skip = r_ref[...].astype(jnp.float32) * sc2_ref[...] + sh2_ref[...]
    o_ref[...] = jnp.maximum(main + skip, 0.0).astype(o_ref.dtype)


def bn_add_relu(y, sc1, sh1, res, res_lane_block, sc2, sh2, *, tm, cout_p):
    Mp = y.shape[0]
    assert Mp % tm == 0
    return pl.pallas_call(
        _bn_add_relu_kernel,
        out_shape=jax.ShapeDtypeStruct((Mp, cout_p), jnp.float32),
        grid_spec=pltpu.PrefetchScalarGridSpec(
            num_scalar_prefetch=0, grid=(Mp // tm,),
            in_specs=[pl.BlockSpec((tm, cout_p), lambda i: (i, 0)),
                      pl.BlockSpec((1, cout_p), lambda i: (0, 0)),
                      pl.BlockSpec((1, cout_p), lambda i: (0, 0)),
                      pl.BlockSpec((tm, cout_p), lambda i: (i, res_lane_block)),
                      pl.BlockSpec((1, cout_p), lambda i: (0, 0)),
                      pl.BlockSpec((1, cout_p), lambda i: (0, 0))],
            out_specs=pl.BlockSpec((tm, cout_p), lambda i: (i, 0))),
        compiler_params=pltpu.CompilerParams(
            dimension_semantics=("parallel",)),
    )(y, sc1.reshape(1, cout_p), sh1.reshape(1, cout_p),
      res, sc2.reshape(1, cout_p), sh2.reshape(1, cout_p))


# ---------------------------------------------------------------------------
# Plain-JAX glue: layout prep only (im2col packing, weight matrices, tiny
# cross-tile stat reduce).  No heavy compute here.
# ---------------------------------------------------------------------------
def _im2col_3x3(x, stride):
    """NHWC -> (N*Ho*Wo, 9*C) patches for a 3x3 / pad=1 / stride-s conv.

    Tap order (kh, kw) row-major, channels fastest within a tap (matches the
    weight matrix built by _w3x3_matrix)."""
    N, H, W, C = x.shape
    Ho = (H - 1) // stride + 1
    Wo = (W - 1) // stride + 1
    xp = jnp.pad(x, ((0, 0), (1, 1), (1, 1), (0, 0)))
    cols = []
    for kh in range(3):
        for kw in range(3):
            cols.append(xp[:, kh:kh + (Ho - 1) * stride + 1:stride,
                           kw:kw + (Wo - 1) * stride + 1:stride, :])
    patches = jnp.concatenate(cols, axis=-1)           # (N, Ho, Wo, 9C)
    return patches.reshape(N * Ho * Wo, 9 * C), Ho, Wo


def _pad2(a, rows_p, cols_p, dtype):
    r, c = a.shape
    return jnp.pad(a, ((0, rows_p - r), (0, cols_p - c))).astype(dtype)


def _w3x3_matrix(w_oihw, kp, cout_p):
    """OIHW 3x3 weight -> (kp, cout_p) bf16 packed-tap matrix."""
    co, ci, kh, kw = w_oihw.shape
    w = jnp.transpose(w_oihw, (2, 3, 1, 0)).reshape(kh * kw * ci, co)
    return _pad2(w, kp, cout_p, jnp.bfloat16)


def _w1x1_center_matrix(w_oihw, cin, kp, cout_p):
    """1x1 / stride-s / pad-0 conv == the center tap (kh=kw=1) of the 3x3 patch."""
    co = w_oihw.shape[0]
    w = jnp.transpose(w_oihw.reshape(co, cin), (1, 0))   # (cin, cout)
    m = jnp.zeros((kp, cout_p), jnp.float32)
    m = m.at[4 * cin:5 * cin, :co].set(w)
    return m.astype(jnp.bfloat16)


def _bn_scale_shift(psum, psq, count, gamma, beta, cout_p):
    """Fold training-mode BN (batch mean / biased var) into scale & shift.

    Stats come from the f32 conv accumulator.  The E[x^2]-E[x]^2 form is fine
    at these magnitudes; a centered/Welford merge would be needed for very
    large M or large activation means (see review)."""
    s = jnp.sum(psum, axis=0).reshape(-1)
    q = jnp.sum(psq, axis=0).reshape(-1)
    mean = s / count
    var = jnp.maximum(q / count - mean * mean, 0.0)
    g = jnp.pad(gamma, (0, cout_p - gamma.shape[0]))
    b = jnp.pad(beta, (0, cout_p - beta.shape[0]))
    scale = g * jax.lax.rsqrt(var + EPS)
    shift = b - mean * scale
    return scale, shift


def resblk_forward(x_nchw, params, stride):
    """relu( bn2(conv2(relu(bn1(conv1(x))))) + extra(x) ), training-mode BN."""
    N, cin, H, W = x_nchw.shape
    cout = params["w1"].shape[0]
    cout_p = _rup(cout, LANE)

    x = jnp.transpose(x_nchw, (0, 2, 3, 1))              # NHWC, f32

    # ---- conv1 (+ projection shortcut) as ONE packed-K matmul ---------------
    p1, Ho, Wo = _im2col_3x3(x.astype(jnp.bfloat16), stride)   # (rows, 9*cin)
    rows = N * Ho * Wo
    tm = _row_tile(rows)
    Mp = _rup(rows, tm)
    kp1 = _rup(9 * cin, LANE)
    a1 = _pad2(p1, Mp, kp1, jnp.bfloat16)

    w1 = _w3x3_matrix(params["w1"], kp1, cout_p)
    projection = (cin != cout)

    if projection:
        # Shortcut weight shares the packed-K input; its output columns are
        # concatenated with conv1's -> one (kp1, 2*cout_p) weight, 256-wide MXU
        # pushes, input read from HBM once.
        ws = _w1x1_center_matrix(params["ws"], cin, kp1, cout_p)
        wcat = jnp.concatenate([w1, ws], axis=1)          # (kp1, 2*cout_p)
        y1s, s1s, q1s = conv_bn_stats(a1, wcat, tm=tm)
        sc1, sh1 = _bn_scale_shift(s1s[..., :cout_p], q1s[..., :cout_p],
                                   float(rows), params["g1"], params["be1"], cout_p)
        scs, shs = _bn_scale_shift(s1s[..., cout_p:], q1s[..., cout_p:],
                                   float(rows), params["gs"], params["bes"], cout_p)
        res, res_blk = y1s, 1                             # shortcut = lanes [cout_p:)
    else:
        # Identity shortcut (PyTorch only builds it when ch_in == ch_out; it
        # only shape-checks for stride == 1, same as the original module).
        assert stride == 1, "identity shortcut requires stride == 1"
        y1s, s1s, q1s = conv_bn_stats(a1, w1, tm=tm)
        sc1, sh1 = _bn_scale_shift(s1s, q1s, float(rows),
                                   params["g1"], params["be1"], cout_p)
        cin_p = _rup(cin, LANE)
        # Keep the identity skip in f32 (reference adds un-quantized x).
        res = _pad2(x.reshape(rows, cin), Mp, cin_p, jnp.float32)
        res_blk = 0
        scs = jnp.ones((cout_p,), jnp.float32)
        shs = jnp.zeros((cout_p,), jnp.float32)

    h = bn_relu(y1s, 0, sc1, sh1, tm=tm, cout_p=cout_p)   # (Mp, cout_p) bf16

    # ---- conv2: 3x3 / stride 1, same packed-K structure ---------------------
    h_img = h[:rows, :cout].reshape(N, Ho, Wo, cout)
    p2, Ho2, Wo2 = _im2col_3x3(h_img, 1)
    assert (Ho2, Wo2) == (Ho, Wo)
    kp2 = _rup(9 * cout, LANE)
    a2 = _pad2(p2, Mp, kp2, jnp.bfloat16)
    w2 = _w3x3_matrix(params["w2"], kp2, cout_p)
    y2, s2, q2 = conv_bn_stats(a2, w2, tm=tm)
    sc2, sh2 = _bn_scale_shift(s2, q2, float(rows),
                               params["g2"], params["be2"], cout_p)

    # ---- fused BN2 + BN_skip + add + ReLU -----------------------------------
    out = bn_add_relu(y2, sc2, sh2, res, res_blk, scs, shs, tm=tm, cout_p=cout_p)

    # Tail: de-pad + NHWC -> NCHW (kept f32/NCHW to match the PyTorch module).
    out = out[:rows, :cout].reshape(N, Ho, Wo, cout)
    return jnp.transpose(out, (0, 3, 1, 2))


# ---------------------------------------------------------------------------
# Plain-JAX reference (same bf16 operand quantization as the kernel path)
# ---------------------------------------------------------------------------
def resblk_reference(x, params, stride):
    def q(a):
        return a.astype(jnp.bfloat16).astype(jnp.float32)

    def conv(inp, w, b, s, pad):
        y = jax.lax.conv_general_dilated(
            q(inp), q(w), window_strides=(s, s),
            padding=((pad, pad), (pad, pad)),
            dimension_numbers=("NCHW", "OIHW", "NCHW"))
        return y + b[None, :, None, None]

    def bn(y, g, b):
        mean = jnp.mean(y, axis=(0, 2, 3), keepdims=True)
        var = jnp.mean((y - mean) ** 2, axis=(0, 2, 3), keepdims=True)
        return ((y - mean) * jax.lax.rsqrt(var + EPS) * g[None, :, None, None]
                + b[None, :, None, None])

    ch_out, ch_in = params["w1"].shape[0], params["w1"].shape[1]
    h = jax.nn.relu(bn(conv(x, params["w1"], params["b1"], stride, 1),
                       params["g1"], params["be1"]))
    main = bn(conv(h, params["w2"], params["b2"], 1, 1),
              params["g2"], params["be2"])
    if ch_in != ch_out:
        skip = bn(conv(x, params["ws"], params["bs"], stride, 0),
                  params["gs"], params["bes"])
    else:
        skip = x
    return jax.nn.relu(main + skip)


# ---------------------------------------------------------------------------
if __name__ == "__main__":
    key = jax.random.PRNGKey(0)

    def make_params(k, ch_in, ch_out, projection):
        ks = jax.random.split(k, 12)
        p = {
            "w1": 0.1 * jax.random.normal(ks[0], (ch_out, ch_in, 3, 3), jnp.float32),
            "b1": 0.1 * jax.random.normal(ks[1], (ch_out,), jnp.float32),
            "g1": 1.0 + 0.1 * jax.random.normal(ks[2], (ch_out,), jnp.float32),
            "be1": 0.1 * jax.random.normal(ks[3], (ch_out,), jnp.float32),
            "w2": 0.1 * jax.random.normal(ks[4], (ch_out, ch_out, 3, 3), jnp.float32),
            "b2": 0.1 * jax.random.normal(ks[5], (ch_out,), jnp.float32),
            "g2": 1.0 + 0.1 * jax.random.normal(ks[6], (ch_out,), jnp.float32),
            "be2": 0.1 * jax.random.normal(ks[7], (ch_out,), jnp.float32),
        }
        if projection:
            p.update({
                "ws": 0.1 * jax.random.normal(ks[8], (ch_out, ch_in, 1, 1), jnp.float32),
                "bs": 0.1 * jax.random.normal(ks[9], (ch_out,), jnp.float32),
                "gs": 1.0 + 0.1 * jax.random.normal(ks[10], (ch_out,), jnp.float32),
                "bes": 0.1 * jax.random.normal(ks[11], (ch_out,), jnp.float32),
            })
        return p

    k1, k2, k3, k4 = jax.random.split(key, 4)

    # Config 1: projection shortcut (ch_in != ch_out), stride 2 — the case the
    # enclosing ResNet actually uses (fused conv1 + 1x1-shortcut matmul).
    x1 = jax.random.normal(k1, (2, 4, 16, 16), jnp.float32)
    prm1 = make_params(k2, 4, 8, projection=True)
    fwd1 = jax.jit(lambda xx, pp: resblk_forward(xx, pp, 2))
    out1 = jax.block_until_ready(fwd1(x1, prm1))
    assert out1.shape == (2, 8, 8, 8), out1.shape
    assert out1.dtype == jnp.float32
    ref1 = resblk_reference(x1, prm1, 2)
    err1 = float(jnp.max(jnp.abs(out1 - ref1)))
    assert err1 < 1e-1, f"projection path: max |out - ref| = {err1}"

    # Config 2: identity shortcut (ch_in == ch_out), stride 1 (f32 skip add).
    x2 = jax.random.normal(k3, (2, 8, 8, 8), jnp.float32)
    prm2 = make_params(k4, 8, 8, projection=False)
    fwd2 = jax.jit(lambda xx, pp: resblk_forward(xx, pp, 1))
    out2 = jax.block_until_ready(fwd2(x2, prm2))
    assert out2.shape == (2, 8, 8, 8), out2.shape
    ref2 = resblk_reference(x2, prm2, 1)
    err2 = float(jnp.max(jnp.abs(out2 - ref2)))
    assert err2 < 1e-1, f"identity path: max |out - ref| = {err2}"

    print("KERNEL_OK")
</pallas_src>

<mosaic_0001>
module attributes {stable_mosaic.version = 11 : i64} {
  func.func @_conv_bn_kernel(%arg0: i32, %arg1: i32, %arg2: memref<128x128xbf16, #tpu.memory_space<vmem>>, %arg3: memref<128x256xbf16, #tpu.memory_space<vmem>>, %arg4: memref<128x256xbf16, #tpu.memory_space<vmem>>, %arg5: memref<1x1x256xf32, #tpu.memory_space<vmem>>, %arg6: memref<1x1x256xf32, #tpu.memory_space<vmem>>, %arg7: memref<128x256xf32, #tpu.memory_space<vmem>>) attributes {dimension_semantics = [#tpu.dimension_semantics<parallel>, #tpu.dimension_semantics<arbitrary>], iteration_bounds = array<i64: 1, 1>, scalar_prefetch = 0 : i64, scratch_operands = 1 : i64, tpu.core_type = #tpu.core_type<tc>, window_params = [{transform_indices = @transform_0, window_bounds = array<i64: 128, 128>}, {transform_indices = @transform_1, window_bounds = array<i64: 128, 256>}, {transform_indices = @transform_2, window_bounds = array<i64: 128, 256>}, {transform_indices = @transform_3, window_bounds = array<i64: 1, 1, 256>}, {transform_indices = @transform_4, window_bounds = array<i64: 1, 1, 256>}]} {
    %c0_i32 = arith.constant 0 : i32
    %0 = arith.cmpi eq, %arg1, %c0_i32 : i32
    %1 = arith.extui %0 : i1 to i32
    %c0_i32_0 = arith.constant 0 : i32
    %2 = arith.cmpi ne, %1, %c0_i32_0 : i32
    scf.if %2 {
      %cst_10 = arith.constant 0.000000e+00 : f32
      %12 = vector.broadcast %cst_10 : f32 to vector<128x256xf32>
      %c0_11 = arith.constant 0 : index
      %c0_12 = arith.constant 0 : index
      %13 = vector.load %arg7[%c0_11, %c0_12] : memref<128x256xf32, #tpu.memory_space<vmem>>, vector<128x256xf32>
      tpu.vector_store %arg7[%c0_11, %c0_12], %12 {strides = array<i32>} : memref<128x256xf32, #tpu.memory_space<vmem>>, vector<128x256xf32>,
    } else {
    }
    %c0 = arith.constant 0 : index
    %c0_1 = arith.constant 0 : index
    %3 = vector.load %arg7[%c0, %c0_1] : memref<128x256xf32, #tpu.memory_space<vmem>>, vector<128x256xf32>
    %c0_2 = arith.constant 0 : index
    %c0_3 = arith.constant 0 : index
    %4 = vector.load %arg2[%c0_2, %c0_3] : memref<128x128xbf16, #tpu.memory_space<vmem>>, vector<128x128xbf16>
    %c0_4 = arith.constant 0 : index
    %c0_5 = arith.constant 0 : index
    %5 = vector.load %arg3[%c0_4, %c0_5] : memref<128x256xbf16, #tpu.memory_space<vmem>>, vector<128x256xbf16>
    %cst = arith.constant dense<0.000000e+00> : vector<128x256xf32>
    %6 = tpu.matmul %4, %5, %cst {dimension_numbers = #tpu.dot_dimension_numbers<[1], [0], [0], [1], [0, 0, 1, 1], [], []>} : vector<128x128xbf16>, vector<128x256xbf16>, vector<128x256xf32> -> vector<128x256xf32>
    %7 = arith.addf %3, %6 : vector<128x256xf32>
    %c0_6 = arith.constant 0 : index
    %c0_7 = arith.constant 0 : index
    %8 = vector.load %arg7[%c0_6, %c0_7] : memref<128x256xf32, #tpu.memory_space<vmem>>, vector<128x256xf32>
    tpu.vector_store %arg7[%c0_6, %c0_7], %7 {strides = array<i32>} : memref<128x256xf32, #tpu.memory_space<vmem>>, vector<128x256xf32>,
    %c0_i32_8 = arith.constant 0 : i32
    %9 = arith.cmpi eq, %arg1, %c0_i32_8 : i32
    %10 = arith.extui %9 : i1 to i32
    %c0_i32_9 = arith.constant 0 : i32
    %11 = arith.cmpi ne, %10, %c0_i32_9 : i32
    scf.if %11 {
      %c0_10 = arith.constant 0 : index
      %c0_11 = arith.constant 0 : index
      %12 = vector.load %arg7[%c0_10, %c0_11] : memref<128x256xf32, #tpu.memory_space<vmem>>, vector<128x256xf32>
      %13 = arith.truncf %12 : vector<128x256xf32> to vector<128x256xbf16>
      %c0_12 = arith.constant 0 : index
      %c0_13 = arith.constant 0 : index
      %14 = vector.load %arg4[%c0_12, %c0_13] : memref<128x256xbf16, #tpu.memory_space<vmem>>, vector<128x256xbf16>
      tpu.vector_store %arg4[%c0_12, %c0_13], %13 {strides = array<i32>} : memref<128x256xbf16, #tpu.memory_space<vmem>>, vector<128x256xbf16>,
      %cst_14 = arith.constant dense<0.000000e+00> : vector<256xf32>
      %15 = vector.multi_reduction <add>, %12, %cst_14 [0] : vector<128x256xf32> to vector<256xf32>
      %16 = vector.shape_cast %15 : vector<256xf32> to vector<1x256xf32>
      %c0_15 = arith.constant 0 : index
      %c0_16 = arith.constant 0 : index
      %c0_17 = arith.constant 0 : index
      %17 = vector.load %arg5[%c0_15, %c0_16, %c0_17] : memref<1x1x256xf32, #tpu.memory_space<vmem>>, vector<1x1x256xf32>
      %18 = vector.shape_cast %17 : vector<1x1x256xf32> to vector<1x256xf32>
      %19 = vector.shape_cast %16 : vector<1x256xf32> to vector<1x1x256xf32>
      tpu.vector_store %arg5[%c0_15, %c0_16, %c0_17], %19 {strides = array<i32>} : memref<1x1x256xf32, #tpu.memory_space<vmem>>, vector<1x1x256xf32>,
      %20 = arith.mulf %12, %12 : vector<128x256xf32>
      %cst_18 = arith.constant dense<0.000000e+00> : vector<256xf32>
      %21 = vector.multi_reduction <add>, %20, %cst_18 [0] : vector<128x256xf32> to vector<256xf32>
      %22 = vector.shape_cast %21 : vector<256xf32> to vector<1x256xf32>
      %c0_19 = arith.constant 0 : index
      %c0_20 = arith.constant 0 : index
      %c0_21 = arith.constant 0 : index
      %23 = vector.load %arg6[%c0_19, %c0_20, %c0_21] : memref<1x1x256xf32, #tpu.memory_space<vmem>>, vector<1x1x256xf32>
      %24 = vector.shape_cast %23 : vector<1x1x256xf32> to vector<1x256xf32>
      %25 = vector.shape_cast %22 : vector<1x256xf32> to vector<1x1x256xf32>
      tpu.vector_store %arg6[%c0_19, %c0_20, %c0_21], %25 {strides = array<i32>} : memref<1x1x256xf32, #tpu.memory_space<vmem>>, vector<1x1x256xf32>,
    } else {
    }
    return
  }
  func.func @transform_0(%arg0: i32, %arg1: i32) -> (i32, i32) {
    %c0_i32 = arith.constant 0 : i32
    return %arg0, %arg1 : i32, i32
  }
  func.func @transform_1(%arg0: i32, %arg1: i32) -> (i32, i32) {
    %c0_i32 = arith.constant 0 : i32
    %c0_i32_0 = arith.constant 0 : i32
    return %arg1, %c0_i32 : i32, i32
  }
  func.func @transform_2(%arg0: i32, %arg1: i32) -> (i32, i32) {
    %c0_i32 = arith.constant 0 : i32
    %c0_i32_0 = arith.constant 0 : i32
    return %arg0, %c0_i32 : i32, i32
  }
  func.func @transform_3(%arg0: i32, %arg1: i32) -> (i32, i32, i32) {
    %c0_i32 = arith.constant 0 : i32
    %c0_i32_0 = arith.constant 0 : i32
    %c0_i32_1 = arith.constant 0 : i32
    return %arg0, %c0_i32, %c0_i32_0 : i32, i32, i32
  }
  func.func @transform_4(%arg0: i32, %arg1: i32) -> (i32, i32, i32) {
    %c0_i32 = arith.constant 0 : i32
    %c0_i32_0 = arith.constant 0 : i32
    %c0_i32_1 = arith.constant 0 : i32
    return %arg0, %c0_i32, %c0_i32_0 : i32, i32, i32
  }
}

module attributes {stable_mosaic.version = 11 : i64} {
  func.func @_bn_relu_kernel(%arg0: i32, %arg1: memref<128x128xbf16, #tpu.memory_space<vmem>>, %arg2: memref<1x128xf32, #tpu.memory_space<vmem>>, %arg3: memref<1x128xf32, #tpu.memory_space<vmem>>, %arg4: memref<128x128xbf16, #tpu.memory_space<vmem>>) attributes {dimension_semantics = [#tpu.dimension_semantics<parallel>], iteration_bounds = array<i64: 1>, scalar_prefetch = 0 : i64, scratch_operands = 0 : i64, tpu.core_type = #tpu.core_type<tc>, window_params = [{transform_indices = @transform_0, window_bounds = array<i64: 128, 128>}, {pipeline_mode = #tpu.pipeline_mode<synchronous>, transform_indices = @transform_1, window_bounds = array<i64: 1, 128>}, {pipeline_mode = #tpu.pipeline_mode<synchronous>, transform_indices = @transform_2, window_bounds = array<i64: 1, 128>}, {transform_indices = @transform_3, window_bounds = array<i64: 128, 128>}]} {
    %c0 = arith.constant 0 : index
    %c0_0 = arith.constant 0 : index
    %0 = vector.load %arg1[%c0, %c0_0] : memref<128x128xbf16, #tpu.memory_space<vmem>>, vector<128x128xbf16>
    %1 = arith.extf %0 : vector<128x128xbf16> to vector<128x128xf32>
    %c0_1 = arith.constant 0 : index
    %c0_2 = arith.constant 0 : index
    %2 = vector.load %arg2[%c0_1, %c0_2] : memref<1x128xf32, #tpu.memory_space<vmem>>, vector<1x128xf32>
    %3 = vector.broadcast %2 : vector<1x128xf32> to vector<128x128xf32>
    %4 = arith.mulf %1, %3 : vector<128x128xf32>
    %c0_3 = arith.constant 0 : index
    %c0_4 = arith.constant 0 : index
    %5 = vector.load %arg3[%c0_3, %c0_4] : memref<1x128xf32, #tpu.memory_space<vmem>>, vector<1x128xf32>
    %6 = vector.broadcast %5 : vector<1x128xf32> to vector<128x128xf32>
    %7 = arith.addf %4, %6 : vector<128x128xf32>
    %cst = arith.constant 0.000000e+00 : f32
    %8 = vector.broadcast %cst : f32 to vector<128x128xf32>
    %9 = arith.maximumf %7, %8 : vector<128x128xf32>
    %10 = arith.truncf %9 : vector<128x128xf32> to vector<128x128xbf16>
    %c0_5 = arith.constant 0 : index
    %c0_6 = arith.constant 0 : index
    %11 = vector.load %arg4[%c0_5, %c0_6] : memref<128x128xbf16, #tpu.memory_space<vmem>>, vector<128x128xbf16>
    tpu.vector_store %arg4[%c0_5, %c0_6], %10 {strides = array<i32>} : memref<128x128xbf16, #tpu.memory_space<vmem>>, vector<128x128xbf16>,
    return
  }
  func.func @transform_0(%arg0: i32) -> (i32, i32) {
    %c0_i32 = arith.constant 0 : i32
    %c0_i32_0 = arith.constant 0 : i32
    return %arg0, %c0_i32 : i32, i32
  }
  func.func @transform_1(%arg0: i32) -> (i32, i32) {
    %c0_i32 = arith.constant 0 : i32
    %c0_i32_0 = arith.constant 0 : i32
    %c0_i32_1 = arith.constant 0 : i32
    return %c0_i32, %c0_i32_0 : i32, i32
  }
  func.func @transform_2(%arg0: i32) -> (i32, i32) {
    %c0_i32 = arith.constant 0 : i32
    %c0_i32_0 = arith.constant 0 : i32
    %c0_i32_1 = arith.constant 0 : i32
    return %c0_i32, %c0_i32_0 : i32, i32
  }
  func.func @transform_3(%arg0: i32) -> (i32, i32) {
    %c0_i32 = arith.constant 0 : i32
    %c0_i32_0 = arith.constant 0 : i32
    return %arg0, %c0_i32 : i32, i32
  }
}

module attributes {stable_mosaic.version = 11 : i64} {
  func.func @_conv_bn_kernel(%arg0: i32, %arg1: i32, %arg2: memref<128x128xbf16, #tpu.memory_space<vmem>>, %arg3: memref<128x128xbf16, #tpu.memory_space<vmem>>, %arg4: memref<128x128xbf16, #tpu.memory_space<vmem>>, %arg5: memref<1x1x128xf32, #tpu.memory_space<vmem>>, %arg6: memref<1x1x128xf32, #tpu.memory_space<vmem>>, %arg7: memref<128x128xf32, #tpu.memory_space<vmem>>) attributes {dimension_semantics = [#tpu.dimension_semantics<parallel>, #tpu.dimension_semantics<arbitrary>], iteration_bounds = array<i64: 1, 1>, scalar_prefetch = 0 : i64, scratch_operands = 1 : i64, tpu.core_type = #tpu.core_type<tc>, window_params = [{transform_indices = @transform_0, window_bounds = array<i64: 128, 128>}, {transform_indices = @transform_1, window_bounds = array<i64: 128, 128>}, {transform_indices = @transform_2, window_bounds = array<i64: 128, 128>}, {transform_indices = @transform_3, window_bounds = array<i64: 1, 1, 128>}, {transform_indices = @transform_4, window_bounds = array<i64: 1, 1, 128>}]} {
    %c0_i32 = arith.constant 0 : i32
    %0 = arith.cmpi eq, %arg1, %c0_i32 : i32
    %1 = arith.extui %0 : i1 to i32
    %c0_i32_0 = arith.constant 0 : i32
    %2 = arith.cmpi ne, %1, %c0_i32_0 : i32
    scf.if %2 {
      %cst_10 = arith.constant 0.000000e+00 : f32
      %12 = vector.broadcast %cst_10 : f32 to vector<128x128xf32>
      %c0_11 = arith.constant 0 : index
      %c0_12 = arith.constant 0 : index
      %13 = vector.load %arg7[%c0_11, %c0_12] : memref<128x128xf32, #tpu.memory_space<vmem>>, vector<128x128xf32>
      tpu.vector_store %arg7[%c0_11, %c0_12], %12 {strides = array<i32>} : memref<128x128xf32, #tpu.memory_space<vmem>>, vector<128x128xf32>,
    } else {
    }
    %c0 = arith.constant 0 : index
    %c0_1 = arith.constant 0 : index
    %3 = vector.load %arg7[%c0, %c0_1] : memref<128x128xf32, #tpu.memory_space<vmem>>, vector<128x128xf32>
    %c0_2 = arith.constant 0 : index
    %c0_3 = arith.constant 0 : index
    %4 = vector.load %arg2[%c0_2, %c0_3] : memref<128x128xbf16, #tpu.memory_space<vmem>>, vector<128x128xbf16>
    %c0_4 = arith.constant 0 : index
    %c0_5 = arith.constant 0 : index
    %5 = vector.load %arg3[%c0_4, %c0_5] : memref<128x128xbf16, #tpu.memory_space<vmem>>, vector<128x128xbf16>
    %cst = arith.constant dense<0.000000e+00> : vector<128x128xf32>
    %6 = tpu.matmul %4, %5, %cst {dimension_numbers = #tpu.dot_dimension_numbers<[1], [0], [0], [1], [0, 0, 1, 1], [], []>} : vector<128x128xbf16>, vector<128x128xbf16>, vector<128x128xf32> -> vector<128x128xf32>
    %7 = arith.addf %3, %6 : vector<128x128xf32>
    %c0_6 = arith.constant 0 : index
    %c0_7 = arith.constant 0 : index
    %8 = vector.load %arg7[%c0_6, %c0_7] : memref<128x128xf32, #tpu.memory_space<vmem>>, vector<128x128xf32>
    tpu.vector_store %arg7[%c0_6, %c0_7], %7 {strides = array<i32>} : memref<128x128xf32, #tpu.memory_space<vmem>>, vector<128x128xf32>,
    %c0_i32_8 = arith.constant 0 : i32
    %9 = arith.cmpi eq, %arg1, %c0_i32_8 : i32
    %10 = arith.extui %9 : i1 to i32
    %c0_i32_9 = arith.constant 0 : i32
    %11 = arith.cmpi ne, %10, %c0_i32_9 : i32
    scf.if %11 {
      %c0_10 = arith.constant 0 : index
      %c0_11 = arith.constant 0 : index
      %12 = vector.load %arg7[%c0_10, %c0_11] : memref<128x128xf32, #tpu.memory_space<vmem>>, vector<128x128xf32>
      %13 = arith.truncf %12 : vector<128x128xf32> to vector<128x128xbf16>
      %c0_12 = arith.constant 0 : index
      %c0_13 = arith.constant 0 : index
      %14 = vector.load %arg4[%c0_12, %c0_13] : memref<128x128xbf16, #tpu.memory_space<vmem>>, vector<128x128xbf16>
      tpu.vector_store %arg4[%c0_12, %c0_13], %13 {strides = array<i32>} : memref<128x128xbf16, #tpu.memory_space<vmem>>, vector<128x128xbf16>,
      %cst_14 = arith.constant dense<0.000000e+00> : vector<128xf32>
      %15 = vector.multi_reduction <add>, %12, %cst_14 [0] : vector<128x128xf32> to vector<128xf32>
      %16 = vector.shape_cast %15 : vector<128xf32> to vector<1x128xf32>
      %c0_15 = arith.constant 0 : index
      %c0_16 = arith.constant 0 : index
      %c0_17 = arith.constant 0 : index
      %17 = vector.load %arg5[%c0_15, %c0_16, %c0_17] : memref<1x1x128xf32, #tpu.memory_space<vmem>>, vector<1x1x128xf32>
      %18 = vector.shape_cast %17 : vector<1x1x128xf32> to vector<1x128xf32>
      %19 = vector.shape_cast %16 : vector<1x128xf32> to vector<1x1x128xf32>
      tpu.vector_store %arg5[%c0_15, %c0_16, %c0_17], %19 {strides = array<i32>} : memref<1x1x128xf32, #tpu.memory_space<vmem>>, vector<1x1x128xf32>,
      %20 = arith.mulf %12, %12 : vector<128x128xf32>
      %cst_18 = arith.constant dense<0.000000e+00> : vector<128xf32>
      %21 = vector.multi_reduction <add>, %20, %cst_18 [0] : vector<128x128xf32> to vector<128xf32>
      %22 = vector.shape_cast %21 : vector<128xf32> to vector<1x128xf32>
      %c0_19 = arith.constant 0 : index
      %c0_20 = arith.constant 0 : index
      %c0_21 = arith.constant 0 : index
      %23 = vector.load %arg6[%c0_19, %c0_20, %c0_21] : memref<1x1x128xf32, #tpu.memory_space<vmem>>, vector<1x1x128xf32>
      %24 = vector.shape_cast %23 : vector<1x1x128xf32> to vector<1x128xf32>
      %25 = vector.shape_cast %22 : vector<1x128xf32> to vector<1x1x128xf32>
      tpu.vector_store %arg6[%c0_19, %c0_20, %c0_21], %25 {strides = array<i32>} : memref<1x1x128xf32, #tpu.memory_space<vmem>>, vector<1x1x128xf32>,
    } else {
    }
    return
  }
  func.func @transform_0(%arg0: i32, %arg1: i32) -> (i32, i32) {
    %c0_i32 = arith.constant 0 : i32
    return %arg0, %arg1 : i32, i32
  }
  func.func @transform_1(%arg0: i32, %arg1: i32) -> (i32, i32) {
    %c0_i32 = arith.constant 0 : i32
    %c0_i32_0 = arith.constant 0 : i32
    return %arg1, %c0_i32 : i32, i32
  }
  func.func @transform_2(%arg0: i32, %arg1: i32) -> (i32, i32) {
    %c0_i32 = arith.constant 0 : i32
    %c0_i32_0 = arith.constant 0 : i32
    return %arg0, %c0_i32 : i32, i32
  }
  func.func @transform_3(%arg0: i32, %arg1: i32) -> (i32, i32, i32) {
    %c0_i32 = arith.constant 0 : i32
    %c0_i32_0 = arith.constant 0 : i32
    %c0_i32_1 = arith.constant 0 : i32
    return %arg0, %c0_i32, %c0_i32_0 : i32, i32, i32
  }
  func.func @transform_4(%arg0: i32, %arg1: i32) -> (i32, i32, i32) {
    %c0_i32 = arith.constant 0 : i32
    %c0_i32_0 = arith.constant 0 : i32
    %c0_i32_1 = arith.constant 0 : i32
    return %arg0, %c0_i32, %c0_i32_0 : i32, i32, i32
  }
}

module attributes {stable_mosaic.version = 11 : i64} {
  func.func @_bn_add_relu_kernel(%arg0: i32, %arg1: memref<128x128xbf16, #tpu.memory_space<vmem>>, %arg2: memref<1x128xf32, #tpu.memory_space<vmem>>, %arg3: memref<1x128xf32, #tpu.memory_space<vmem>>, %arg4: memref<128x128xbf16, #tpu.memory_space<vmem>>, %arg5: memref<1x128xf32, #tpu.memory_space<vmem>>, %arg6: memref<1x128xf32, #tpu.memory_space<vmem>>, %arg7: memref<128x128xf32, #tpu.memory_space<vmem>>) attributes {dimension_semantics = [#tpu.dimension_semantics<parallel>], iteration_bounds = array<i64: 1>, scalar_prefetch = 0 : i64, scratch_operands = 0 : i64, tpu.core_type = #tpu.core_type<tc>, window_params = [{transform_indices = @transform_0, window_bounds = array<i64: 128, 128>}, {pipeline_mode = #tpu.pipeline_mode<synchronous>, transform_indices = @transform_1, window_bounds = array<i64: 1, 128>}, {pipeline_mode = #tpu.pipeline_mode<synchronous>, transform_indices = @transform_2, window_bounds = array<i64: 1, 128>}, {transform_indices = @transform_3, window_bounds = array<i64: 128, 128>}, {pipeline_mode = #tpu.pipeline_mode<synchronous>, transform_indices = @transform_4, window_bounds = array<i64: 1, 128>}, {pipeline_mode = #tpu.pipeline_mode<synchronous>, transform_indices = @transform_5, window_bounds = array<i64: 1, 128>}, {transform_indices = @transform_6, window_bounds = array<i64: 128, 128>}]} {
    %c0 = arith.constant 0 : index
    %c0_0 = arith.constant 0 : index
    %0 = vector.load %arg1[%c0, %c0_0] : memref<128x128xbf16, #tpu.memory_space<vmem>>, vector<128x128xbf16>
    %1 = arith.extf %0 : vector<128x128xbf16> to vector<128x128xf32>
    %c0_1 = arith.constant 0 : index
    %c0_2 = arith.constant 0 : index
    %2 = vector.load %arg2[%c0_1, %c0_2] : memref<1x128xf32, #tpu.memory_space<vmem>>, vector<1x128xf32>
    %3 = vector.broadcast %2 : vector<1x128xf32> to vector<128x128xf32>
    %4 = arith.mulf %1, %3 : vector<128x128xf32>
    %c0_3 = arith.constant 0 : index
    %c0_4 = arith.constant 0 : index
    %5 = vector.load %arg3[%c0_3, %c0_4] : memref<1x128xf32, #tpu.memory_space<vmem>>, vector<1x128xf32>
    %6 = vector.broadcast %5 : vector<1x128xf32> to vector<128x128xf32>
    %7 = arith.addf %4, %6 : vector<128x128xf32>
    %c0_5 = arith.constant 0 : index
    %c0_6 = arith.constant 0 : index
    %8 = vector.load %arg4[%c0_5, %c0_6] : memref<128x128xbf16, #tpu.memory_space<vmem>>, vector<128x128xbf16>
    %9 = arith.extf %8 : vector<128x128xbf16> to vector<128x128xf32>
    %c0_7 = arith.constant 0 : index
    %c0_8 = arith.constant 0 : index
    %10 = vector.load %arg5[%c0_7, %c0_8] : memref<1x128xf32, #tpu.memory_space<vmem>>, vector<1x128xf32>
    %11 = vector.broadcast %10 : vector<1x128xf32> to vector<128x128xf32>
    %12 = arith.mulf %9, %11 : vector<128x128xf32>
    %c0_9 = arith.constant 0 : index
    %c0_10 = arith.constant 0 : index
    %13 = vector.load %arg6[%c0_9, %c0_10] : memref<1x128xf32, #tpu.memory_space<vmem>>, vector<1x128xf32>
    %14 = vector.broadcast %13 : vector<1x128xf32> to vector<128x128xf32>
    %15 = arith.addf %12, %14 : vector<128x128xf32>
    %16 = arith.addf %7, %15 : vector<128x128xf32>
    %cst = arith.constant 0.000000e+00 : f32
    %17 = vector.broadcast %cst : f32 to vector<128x128xf32>
    %18 = arith.maximumf %16, %17 : vector<128x128xf32>
    %c0_11 = arith.constant 0 : index
    %c0_12 = arith.constant 0 : index
    %19 = vector.load %arg7[%c0_11, %c0_12] : memref<128x128xf32, #tpu.memory_space<vmem>>, vector<128x128xf32>
    tpu.vector_store %arg7[%c0_11, %c0_12], %18 {strides = array<i32>} : memref<128x128xf32, #tpu.memory_space<vmem>>, vector<128x128xf32>,
    return
  }
  func.func @transform_0(%arg0: i32) -> (i32, i32) {
    %c0_i32 = arith.constant 0 : i32
    %c0_i32_0 = arith.constant 0 : i32
    return %arg0, %c0_i32 : i32, i32
  }
  func.func @transform_1(%arg0: i32) -> (i32, i32) {
    %c0_i32 = arith.constant 0 : i32
    %c0_i32_0 = arith.constant 0 : i32
    %c0_i32_1 = arith.constant 0 : i32
    return %c0_i32, %c0_i32_0 : i32, i32
  }
  func.func @transform_2(%arg0: i32) -> (i32, i32) {
    %c0_i32 = arith.constant 0 : i32
    %c0_i32_0 = arith.constant 0 : i32
    %c0_i32_1 = arith.constant 0 : i32
    return %c0_i32, %c0_i32_0 : i32, i32
  }
  func.func @transform_3(%arg0: i32) -> (i32, i32) {
    %c1_i32 = arith.constant 1 : i32
    %c0_i32 = arith.constant 0 : i32
    return %arg0, %c1_i32 : i32, i32
  }
  func.func @transform_4(%arg0: i32) -> (i32, i32) {
    %c0_i32 = arith.constant 0 : i32
    %c0_i32_0 = arith.constant 0 : i32
    %c0_i32_1 = arith.constant 0 : i32
    return %c0_i32, %c0_i32_0 : i32, i32
  }
  func.func @transform_5(%arg0: i32) -> (i32, i32) {
    %c0_i32 = arith.constant 0 : i32
    %c0_i32_0 = arith.constant 0 : i32
    %c0_i32_1 = arith.constant 0 : i32
    return %c0_i32, %c0_i32_0 : i32, i32
  }
  func.func @transform_6(%arg0: i32) -> (i32, i32) {
    %c0_i32 = arith.constant 0 : i32
    %c0_i32_0 = arith.constant 0 : i32
    return %arg0, %c0_i32 : i32, i32
  }
}

</mosaic_0001>

<llo_original>
// kernel: _lambda_.5
$region0: #{_lambda_.5}
  #allocation0 [shape = 'u32[]', space=smem, size = 0x4, offset = 0x4, fixed_abs, tag = 'smem constant byte address 0x4 - core index']
  #allocation1 [shape = 'u32[144,128]{1,0:T(1,128)}', space=vmem, size = 0x12000, scoped, tag = 'internal scratch']
  %s0 = inlined_call_operand.vmem [shape: bf16[128,256], index: 0, kind: input, shape index: {}]
  %s1 = inlined_call_operand.vmem [shape: f32[1,128], index: 1, kind: input, shape index: {}]
  %s2 = inlined_call_operand.vmem [shape: f32[1,128], index: 2, kind: input, shape index: {}]
  %s3 = inlined_call_operand.vmem [shape: bf16[128,128], index: 3, kind: output, shape index: {}]
  %s4 = sld [smem:[#allocation0]]
  $region63: #{_lambda_.5} parent=0
    _
  %s6 = ssub.s32 1, %s4
  %s7 = scalar_select 0, %s6, %s4
  $region1: #{_lambda_.5} parent=0
    #allocation2 [shape = 'u8[32768]{0}', space=vmem, size = 0x8000, scoped, tag = 'input window, operand 0, single buffered']
    // Predicated region
    $region2: #{_lambda_.5} parent=1 // pred_check
      _
    $region3: #{_lambda_.5} parent=1 // pred_check_branch
      %9 = sbr.rel (0) target = $region5
    $region4: #{_lambda_.5} parent=1 // pred_region
      // Predicated region
      $region6: #{_lambda_.5} parent=4 // pred_check
        _
      $region7: #{_lambda_.5} parent=4 // pred_check_branch
        %11 = sbr.rel (0) target = $region9
      $region8: #{_lambda_.5} parent=4 // pred_region
        // Predicated region
        $region10: #{_lambda_.5} parent=8 // pred_check
          _
        $region11: #{_lambda_.5} parent=8 // pred_check_branch
          %13 = sbr.rel target = $region13
        $region12: #{_lambda_.5} parent=8 // pred_region
          // Predicated region
          $region25: #{_lambda_.5} parent=12 // pred_check
            _
          $region26: #{_lambda_.5} parent=12 // pred_check_branch
            %58 = sbr.rel (0) target = $region28
          $region27: #{_lambda_.5} parent=12 // pred_region
            loop: start=0, step=1, limit=1
            $region29: #{_lambda_.5} parent=27 // loop_pre_header
              _
            $region30: #{_lambda_.5} parent=27 // loop_header
              %s60 = sphi 0, %s64
              %p61 = scmp.ge.s32.totalorder %s60, 1
              %s65 = sphi %s0, %s0
              %s66 = sphi [#allocation2], [#allocation2]
            $region31: #{_lambda_.5} parent=27 // loop_header_branch
              %63 = sbr.rel (%p61) target = $region35
            $region32: #{_lambda_.5} parent=27 // loop_body
              _
            $region33: #{_lambda_.5} parent=27 // loop_footer
              %s64 = sadd.s32 1, %s60
            $region34: #{_lambda_.5} parent=27 // loop_footer_branch
              %59 = sbr.rel target = $region30
            $region35: #{_lambda_.5} parent=27 // loop_exit
              _
            loop: start=0, step=1, limit=1
            $region36: #{_lambda_.5} parent=27 // loop_pre_header
              _
            $region37: #{_lambda_.5} parent=27 // loop_header
              %s69 = sphi 0, %s73
              %p70 = scmp.ge.s32.totalorder %s69, 1
              %s74 = sphi %s0, %s0
              %s75 = sphi [#allocation2], [#allocation2]
            $region38: #{_lambda_.5} parent=27 // loop_header_branch
              %72 = sbr.rel (%p70) target = $region42
            $region39: #{_lambda_.5} parent=27 // loop_body
              %v76 = vld [vmem:[%s74] sm:$0xf]
              %77 = vst [vmem:[%s75] sm:$0xf] %v76
              %v78 = vld [vmem:[%s74 + $0x8] sm:$0xf]
              %79 = vst [vmem:[%s75 + $0x4] sm:$0xf] %v78
              %v80 = vld [vmem:[%s74 + $0x10] sm:$0xf]
              %81 = vst [vmem:[%s75 + $0x8] sm:$0xf] %v80
              %v82 = vld [vmem:[%s74 + $0x18] sm:$0xf]
              %83 = vst [vmem:[%s75 + $0xc] sm:$0xf] %v82
              %v84 = vld [vmem:[%s74 + $0x20] sm:$0xf]
              %85 = vst [vmem:[%s75 + $0x10] sm:$0xf] %v84
              %v86 = vld [vmem:[%s74 + $0x28] sm:$0xf]
              %87 = vst [vmem:[%s75 + $0x14] sm:$0xf] %v86
              %v88 = vld [vmem:[%s74 + $0x30] sm:$0xf]
              %89 = vst [vmem:[%s75 + $0x18] sm:$0xf] %v88
              %v90 = vld [vmem:[%s74 + $0x38] sm:$0xf]
              %91 = vst [vmem:[%s75 + $0x1c] sm:$0xf] %v90
              %v92 = vld [vmem:[%s74 + $0x40] sm:$0xf]
              %93 = vst [vmem:[%s75 + $0x20] sm:$0xf] %v92
              %v94 = vld [vmem:[%s74 + $0x48] sm:$0xf]
              %95 = vst [vmem:[%s75 + $0x24] sm:$0xf] %v94
              %v96 = vld [vmem:[%s74 + $0x50] sm:$0xf]
              %97 = vst [vmem:[%s75 + $0x28] sm:$0xf] %v96
              %v98 = vld [vmem:[%s74 + $0x58] sm:$0xf]
              %99 = vst [vmem:[%s75 + $0x2c] sm:$0xf] %v98
              %v100 = vld [vmem:[%s74 + $0x60] sm:$0xf]
              %101 = vst [vmem:[%s75 + $0x30] sm:$0xf] %v100
              %v102 = vld [vmem:[%s74 + $0x68] sm:$0xf]
              %103 = vst [vmem:[%s75 + $0x34] sm:$0xf] %v102
              %v104 = vld [vmem:[%s74 + $0x70] sm:$0xf]
              %105 = vst [vmem:[%s75 + $0x38] sm:$0xf] %v104
              %v106 = vld [vmem:[%s74 + $0x78] sm:$0xf]
              %107 = vst [vmem:[%s75 + $0x3c] sm:$0xf] %v106
            $region40: #{_lambda_.5} parent=27 // loop_footer
              %s73 = sadd.s32 1, %s69
            $region41: #{_lambda_.5} parent=27 // loop_footer_branch
              %68 = sbr.rel target = $region37
            $region42: #{_lambda_.5} parent=27 // loop_exit
              _
          $region28: #{_lambda_.5} parent=12 // pred_fallthru
            _
        $region13: #{_lambda_.5} parent=8 // pred_fallthru
          _
        // Predicated region
        $region14: #{_lambda_.5} parent=8 // pred_check
          _
        $region15: #{_lambda_.5} parent=8 // pred_check_branch
          %15 = sbr.rel (0) target = $region17
        $region16: #{_lambda_.5} parent=8 // pred_region
          loop: start=0, step=1, limit=1
          $region18: #{_lambda_.5} parent=16 // loop_pre_header
            _
          $region19: #{_lambda_.5} parent=16 // loop_header
            %s18 = sphi 0, %s22
            %p19 = scmp.ge.s32.totalorder %s18, 1
            %s23 = sphi %s0, %s0
            %s24 = sphi [#allocation2], [#allocation2]
          $region20: #{_lambda_.5} parent=16 // loop_header_branch
            %21 = sbr.rel (%p19) target = $region24
          $region21: #{_lambda_.5} parent=16 // loop_body
            %v25 = vld [vmem:[%s23] sm:$0xf]
            %26 = vst [vmem:[%s24] sm:$0xf] %v25
            %v27 = vld [vmem:[%s23 + $0x8] sm:$0xf]
            %28 = vst [vmem:[%s24 + $0x4] sm:$0xf] %v27
            %v29 = vld [vmem:[%s23 + $0x10] sm:$0xf]
            %30 = vst [vmem:[%s24 + $0x8] sm:$0xf] %v29
            %v31 = vld [vmem:[%s23 + $0x18] sm:$0xf]
            %32 = vst [vmem:[%s24 + $0xc] sm:$0xf] %v31
            %v33 = vld [vmem:[%s23 + $0x20] sm:$0xf]
            %34 = vst [vmem:[%s24 + $0x10] sm:$0xf] %v33
            %v35 = vld [vmem:[%s23 + $0x28] sm:$0xf]
            %36 = vst [vmem:[%s24 + $0x14] sm:$0xf] %v35
            %v37 = vld [vmem:[%s23 + $0x30] sm:$0xf]
            %38 = vst [vmem:[%s24 + $0x18] sm:$0xf] %v37
            %v39 = vld [vmem:[%s23 + $0x38] sm:$0xf]
            %40 = vst [vmem:[%s24 + $0x1c] sm:$0xf] %v39
            %v41 = vld [vmem:[%s23 + $0x40] sm:$0xf]
            %42 = vst [vmem:[%s24 + $0x20] sm:$0xf] %v41
            %v43 = vld [vmem:[%s23 + $0x48] sm:$0xf]
            %44 = vst [vmem:[%s24 + $0x24] sm:$0xf] %v43
            %v45 = vld [vmem:[%s23 + $0x50] sm:$0xf]
            %46 = vst [vmem:[%s24 + $0x28] sm:$0xf] %v45
            %v47 = vld [vmem:[%s23 + $0x58] sm:$0xf]
            %48 = vst [vmem:[%s24 + $0x2c] sm:$0xf] %v47
            %v49 = vld [vmem:[%s23 + $0x60] sm:$0xf]
            %50 = vst [vmem:[%s24 + $0x30] sm:$0xf] %v49
            %v51 = vld [vmem:[%s23 + $0x68] sm:$0xf]
            %52 = vst [vmem:[%s24 + $0x34] sm:$0xf] %v51
            %v53 = vld [vmem:[%s23 + $0x70] sm:$0xf]
            %54 = vst [vmem:[%s24 + $0x38] sm:$0xf] %v53
            %v55 = vld [vmem:[%s23 + $0x78] sm:$0xf]
            %56 = vst [vmem:[%s24 + $0x3c] sm:$0xf] %v55
          $region22: #{_lambda_.5} parent=16 // loop_footer
            %s22 = sadd.s32 1, %s18
          $region23: #{_lambda_.5} parent=16 // loop_footer_branch
            %17 = sbr.rel target = $region19
          $region24: #{_lambda_.5} parent=16 // loop_exit
            _
        $region17: #{_lambda_.5} parent=8 // pred_fallthru
          _
      $region9: #{_lambda_.5} parent=4 // pred_fallthru
        _
      %108 = vnop
    $region5: #{_lambda_.5} parent=1 // pred_fallthru
      _
    // Predicated region
    $region43: #{_lambda_.5} parent=1 // pred_check
      _
    $region44: #{_lambda_.5} parent=1 // pred_check_branch
      %110 = sbr.rel (0) target = $region46
    $region45: #{_lambda_.5} parent=1 // pred_region
      _
    $region46: #{_lambda_.5} parent=1 // pred_fallthru
      _
    // Predicated region
    $region47: #{_lambda_.5} parent=1 // pred_check
      _
    $region48: #{_lambda_.5} parent=1 // pred_check_branch
      %112 = sbr.rel (0) target = $region50
    $region49: #{_lambda_.5} parent=1 // pred_region
      _
    $region50: #{_lambda_.5} parent=1 // pred_fallthru
      _
    // Predicated region
    $region51: #{_lambda_.5} parent=1 // pred_check
      _
    $region52: #{_lambda_.5} parent=1 // pred_check_branch
      %114 = sbr.rel (0) target = $region54
    $region53: #{_lambda_.5} parent=1 // pred_region
      _
    $region54: #{_lambda_.5} parent=1 // pred_fallthru
      _
    %v115 = vld [vmem:[#allocation2] sm:$0xf]
    %v116 = vld [vmem:[#allocation2 + $0x4] sm:$0xf]
    %v117 = vld [vmem:[#allocation2 + $0x8] sm:$0xf]
    %v118 = vld [vmem:[#allocation2 + $0xc] sm:$0xf]
    %v119 = vld [vmem:[#allocation2 + $0x10] sm:$0xf]
    %v120 = vld [vmem:[#allocation2 + $0x14] sm:$0xf]
    %v121 = vld [vmem:[#allocation2 + $0x18] sm:$0xf]
    %v122 = vld [vmem:[#allocation2 + $0x1c] sm:$0xf]
    %v123 = vld [vmem:[#allocation2 + $0x20] sm:$0xf]
    %v124 = vld [vmem:[#allocation2 + $0x24] sm:$0xf]
    %v125 = vld [vmem:[#allocation2 + $0x28] sm:$0xf]
    %v126 = vld [vmem:[#allocation2 + $0x2c] sm:$0xf]
    %v127 = vld [vmem:[#allocation2 + $0x30] sm:$0xf]
    %v128 = vld [vmem:[#allocation2 + $0x34] sm:$0xf]
    %v129 = vld [vmem:[#allocation2 + $0x38] sm:$0xf]
    %v130 = vld [vmem:[#allocation2 + $0x3c] sm:$0xf]
    %v131 = vunpack.c.l.bf16 %v115
    %v132 = vunpack.c.l.bf16 %v116
    %v133 = vunpack.c.l.bf16 %v117
    %v134 = vunpack.c.l.bf16 %v118
    %v135 = vunpack.c.l.bf16 %v119
    %v136 = vunpack.c.l.bf16 %v120
    %v137 = vunpack.c.l.bf16 %v121
    %v138 = vunpack.c.l.bf16 %v122
    %v139 = vunpack.c.l.bf16 %v123
    %v140 = vunpack.c.l.bf16 %v124
    %v141 = vunpack.c.l.bf16 %v125
    %v142 = vunpack.c.l.bf16 %v126
    %v143 = vunpack.c.l.bf16 %v127
    %v144 = vunpack.c.l.bf16 %v128
    %v145 = vunpack.c.l.bf16 %v129
    %v146 = vunpack.c.l.bf16 %v130
    %v147 = vld [vmem:[%s1] sm:$0x1]
    %v149 = vlaneseq
    %v150 = vshrl.u32 %v149, 7
    %v151 = vsub.s32 0, %v150
    %v152 = vrot.slane %v147, %v151
    %v154 = vmul.f32 %v131, %v152
    %v155 = vmul.f32 %v132, %v152
    %v156 = vmul.f32 %v133, %v152
    %v157 = vmul.f32 %v134, %v152
    %v158 = vmul.f32 %v135, %v152
    %v159 = vmul.f32 %v136, %v152
    %v160 = vmul.f32 %v137, %v152
    %v161 = vmul.f32 %v138, %v152
    %v162 = vmul.f32 %v139, %v152
    %v163 = vmul.f32 %v140, %v152
    %v164 = vmul.f32 %v141, %v152
    %v165 = vmul.f32 %v142, %v152
    %v166 = vmul.f32 %v143, %v152
    %v167 = vmul.f32 %v144, %v152
    %v168 = vmul.f32 %v145, %v152
    %v169 = vmul.f32 %v146, %v152
    %v170 = vld [vmem:[%s2] sm:$0x1]
    %v172 = vlaneseq
    %v173 = vshrl.u32 %v172, 7
    %v174 = vsub.s32 0, %v173
    %v175 = vrot.slane %v170, %v174
    %v177 = vadd.f32 %v154, %v175
    %v178 = vadd.f32 %v155, %v175
    %v179 = vadd.f32 %v156, %v175
    %v180 = vadd.f32 %v157, %v175
    %v181 = vadd.f32 %v158, %v175
    %v182 = vadd.f32 %v159, %v175
    %v183 = vadd.f32 %v160, %v175
    %v184 = vadd.f32 %v161, %v175
    %v185 = vadd.f32 %v162, %v175
    %v186 = vadd.f32 %v163, %v175
    %v187 = vadd.f32 %v164, %v175
    %v188 = vadd.f32 %v165, %v175
    %v189 = vadd.f32 %v166, %v175
    %v190 = vadd.f32 %v167, %v175
    %v191 = vadd.f32 %v168, %v175
    %v192 = vadd.f32 %v169, %v175
    %v193 = vmax.f32 %v177, 0.0
    %v194 = vmax.f32 %v178, 0.0
    %v195 = vmax.f32 %v179, 0.0
    %v196 = vmax.f32 %v180, 0.0
    %v197 = vmax.f32 %v181, 0.0
    %v198 = vmax.f32 %v182, 0.0
    %v199 = vmax.f32 %v183, 0.0
    %v200 = vmax.f32 %v184, 0.0
    %v201 = vmax.f32 %v185, 0.0
    %v202 = vmax.f32 %v186, 0.0
    %v203 = vmax.f32 %v187, 0.0
    %v204 = vmax.f32 %v188, 0.0
    %v205 = vmax.f32 %v189, 0.0
    %v206 = vmax.f32 %v190, 0.0
    %v207 = vmax.f32 %v191, 0.0
    %v208 = vmax.f32 %v192, 0.0
    %v209 = vpack.c.bf16 %v194, %v193
    %v210 = vpack.c.bf16 %v196, %v195
    %v211 = vpack.c.bf16 %v198, %v197
    %v212 = vpack.c.bf16 %v200, %v199
    %v213 = vpack.c.bf16 %v202, %v201
    %v214 = vpack.c.bf16 %v204, %v203
    %v215 = vpack.c.bf16 %v206, %v205
    %v216 = vpack.c.bf16 %v208, %v207
    %v225 = vunpack.c.l.b16 %v209
    %v226 = vunpack.c.h.b16 %v209
    %v227 = vunpack.c.l.b16 %v210
    %v228 = vunpack.c.h.b16 %v210
    %v229 = vunpack.c.l.b16 %v211
    %v230 = vunpack.c.h.b16 %v211
    %v231 = vunpack.c.l.b16 %v212
    %v232 = vunpack.c.h.b16 %v212
    %v233 = vunpack.c.l.b16 %v213
    %v234 = vunpack.c.h.b16 %v213
    %v235 = vunpack.c.l.b16 %v214
    %v236 = vunpack.c.h.b16 %v214
    %v237 = vunpack.c.l.b16 %v215
    %v238 = vunpack.c.h.b16 %v215
    %v239 = vunpack.c.l.b16 %v216
    %v240 = vunpack.c.h.b16 %v216
    %v241 = vpack.c.b16 %v225, %v225
    %v242 = vpack.c.b16 %v226, %v226
    %v243 = vpack.c.b16 %v227, %v227
    %v244 = vpack.c.b16 %v228, %v228
    %v245 = vpack.c.b16 %v229, %v229
    %v246 = vpack.c.b16 %v230, %v230
    %v247 = vpack.c.b16 %v231, %v231
    %v248 = vpack.c.b16 %v232, %v232
    %v249 = vpack.c.b16 %v233, %v233
    %v250 = vpack.c.b16 %v234, %v234
    %v251 = vpack.c.b16 %v235, %v235
    %v252 = vpack.c.b16 %v236, %v236
    %v253 = vpack.c.b16 %v237, %v237
    %v254 = vpack.c.b16 %v238, %v238
    %v255 = vpack.c.b16 %v239, %v239
    %v256 = vpack.c.b16 %v240, %v240
    %273 = vst [vmem:[%s3] sm:$0xf] %v241
    %274 = vst [vmem:[%s3 + $0x4] sm:$0xf] %v242
    %275 = vst [vmem:[%s3 + $0x8] sm:$0xf] %v243
    %276 = vst [vmem:[%s3 + $0xc] sm:$0xf] %v244
    %277 = vst [vmem:[%s3 + $0x10] sm:$0xf] %v245
    %278 = vst [vmem:[%s3 + $0x14] sm:$0xf] %v246
    %279 = vst [vmem:[%s3 + $0x18] sm:$0xf] %v247
    %280 = vst [vmem:[%s3 + $0x1c] sm:$0xf] %v248
    %281 = vst [vmem:[%s3 + $0x20] sm:$0xf] %v249
    %282 = vst [vmem:[%s3 + $0x24] sm:$0xf] %v250
    %283 = vst [vmem:[%s3 + $0x28] sm:$0xf] %v251
    %284 = vst [vmem:[%s3 + $0x2c] sm:$0xf] %v252
    %285 = vst [vmem:[%s3 + $0x30] sm:$0xf] %v253
    %286 = vst [vmem:[%s3 + $0x34] sm:$0xf] %v254
    %287 = vst [vmem:[%s3 + $0x38] sm:$0xf] %v255
    %288 = vst [vmem:[%s3 + $0x3c] sm:$0xf] %v256
    // Predicated region
    $region55: #{_lambda_.5} parent=1 // pred_check
      _
    $region56: #{_lambda_.5} parent=1 // pred_check_branch
      %290 = sbr.rel (0) target = $region58
    $region57: #{_lambda_.5} parent=1 // pred_region
      _
    $region58: #{_lambda_.5} parent=1 // pred_fallthru
      _
    // Predicated region
    $region59: #{_lambda_.5} parent=1 // pred_check
      _
    $region60: #{_lambda_.5} parent=1 // pred_check_branch
      %292 = sbr.rel (0) target = $region62
    $region61: #{_lambda_.5} parent=1 // pred_region
      _
    $region62: #{_lambda_.5} parent=1 // pred_fallthru
      _

// kernel: _lambda_.4
$region0: #{_lambda_.4}
  #allocation0 [shape = 'u32[]', space=smem, size = 0x4, offset = 0x4, fixed_abs, tag = 'smem constant byte address 0x4 - core index']
  #allocation1 [shape = 'u32[144,128]{1,0:T(1,128)}', space=vmem, size = 0x12000, scoped, tag = 'internal scratch']
  #allocation2 [shape = 'f32[128,256]{1,0:T(8,128)}', space=vmem, size = 0x20000, scoped, tag = 'scratch operand']
  %s0 = inlined_call_operand.vmem [shape: bf16[128,128], index: 0, kind: input, shape index: {}]
  %s1 = inlined_call_operand.vmem [shape: bf16[128,256], index: 1, kind: input, shape index: {}]
  %s2 = inlined_call_operand.vmem [shape: bf16[128,256], index: 2, kind: output, shape index: {0}]
  %s3 = inlined_call_operand.vmem [shape: f32[1,1,256], index: 3, kind: output, shape index: {1}]
  %s4 = inlined_call_operand.vmem [shape: f32[1,1,256], index: 4, kind: output, shape index: {2}]
  %5 = xla_tuple %s2, %s3, %s4
  %s6 = sld [smem:[#allocation0]]
  $region42: #{_lambda_.4} parent=0
    _
  %s8 = ssub.s32 1, %s6
  %s9 = scalar_select 0, %s8, %s6
  // Predicated region
  $region2: #{_lambda_.4} parent=0 // pred_check
    _
  $region3: #{_lambda_.4} parent=0 // pred_check_branch
    %11 = sbr.rel (0) target = $region5
  $region4: #{_lambda_.4} parent=0 // pred_region
    _
  $region5: #{_lambda_.4} parent=0 // pred_fallthru
    _
  // Predicated region
  $region6: #{_lambda_.4} parent=0 // pred_check
    _
  $region7: #{_lambda_.4} parent=0 // pred_check_branch
    %13 = sbr.rel (0) target = $region9
  $region8: #{_lambda_.4} parent=0 // pred_region
    _
  $region9: #{_lambda_.4} parent=0 // pred_fallthru
    _
  %p15 = scmp.eq.s32.totalorder 0, 0
  // Predicated region
  $region10: #{_lambda_.4} parent=0 // pred_check
    %p16 = pneg %p15
  $region11: #{_lambda_.4} parent=0 // pred_check_branch
    %18 = sbr.rel (%p16) target = $region13
  $region12: #{_lambda_.4} parent=0 // pred_region
    %19 = vst [vmem:[#allocation2] sm:$0xff] 0.0
    %20 = vst [vmem:[#allocation2 + $0x8] sm:$0xff] 0.0
    %21 = vst [vmem:[#allocation2 + $0x10] sm:$0xff] 0.0
    %22 = vst [vmem:[#allocation2 + $0x18] sm:$0xff] 0.0
    %23 = vst [vmem:[#allocation2 + $0x20] sm:$0xff] 0.0
    %24 = vst [vmem:[#allocation2 + $0x28] sm:$0xff] 0.0
    %25 = vst [vmem:[#allocation2 + $0x30] sm:$0xff] 0.0
    %26 = vst [vmem:[#allocation2 + $0x38] sm:$0xff] 0.0
    %27 = vst [vmem:[#allocation2 + $0x40] sm:$0xff] 0.0
    %28 = vst [vmem:[#allocation2 + $0x48] sm:$0xff] 0.0
    %29 = vst [vmem:[#allocation2 + $0x50] sm:$0xff] 0.0
    %30 = vst [vmem:[#allocation2 + $0x58] sm:$0xff] 0.0
    %31 = vst [vmem:[#allocation2 + $0x60] sm:$0xff] 0.0
    %32 = vst [vmem:[#allocation2 + $0x68] sm:$0xff] 0.0
    %33 = vst [vmem:[#allocation2 + $0x70] sm:$0xff] 0.0
    %34 = vst [vmem:[#allocation2 + $0x78] sm:$0xff] 0.0
    %35 = vst [vmem:[#allocation2 + $0x80] sm:$0xff] 0.0
    %36 = vst [vmem:[#allocation2 + $0x88] sm:$0xff] 0.0
    %37 = vst [vmem:[#allocation2 + $0x90] sm:$0xff] 0.0
    %38 = vst [vmem:[#allocation2 + $0x98] sm:$0xff] 0.0
    %39 = vst [vmem:[#allocation2 + $0xa0] sm:$0xff] 0.0
    %40 = vst [vmem:[#allocation2 + $0xa8] sm:$0xff] 0.0
    %41 = vst [vmem:[#allocation2 + $0xb0] sm:$0xff] 0.0
    %42 = vst [vmem:[#allocation2 + $0xb8] sm:$0xff] 0.0
    %43 = vst [vmem:[#allocation2 + $0xc0] sm:$0xff] 0.0
    %44 = vst [vmem:[#allocation2 + $0xc8] sm:$0xff] 0.0
    %45 = vst [vmem:[#allocation2 + $0xd0] sm:$0xff] 0.0
    %46 = vst [vmem:[#allocation2 + $0xd8] sm:$0xff] 0.0
    %47 = vst [vmem:[#allocation2 + $0xe0] sm:$0xff] 0.0
    %48 = vst [vmem:[#allocation2 + $0xe8] sm:$0xff] 0.0
    %49 = vst [vmem:[#allocation2 + $0xf0] sm:$0xff] 0.0
    %50 = vst [vmem:[#allocation2 + $0xf8] sm:$0xff] 0.0
  $region13: #{_lambda_.4} parent=0 // pred_fallthru
    _
  %v51 = vld [vmem:[#allocation2] sm:$0xff]
  %v52 = vld [vmem:[#allocation2 + $0x8] sm:$0xff]
  %v53 = vld [vmem:[#allocation2 + $0x10] sm:$0xff]
  %v54 = vld [vmem:[#allocation2 + $0x18] sm:$0xff]
  %v55 = vld [vmem:[#allocation2 + $0x20] sm:$0xff]
  %v56 = vld [vmem:[#allocation2 + $0x28] sm:$0xff]
  %v57 = vld [vmem:[#allocation2 + $0x30] sm:$0xff]
  %v58 = vld [vmem:[#allocation2 + $0x38] sm:$0xff]
  %v59 = vld [vmem:[#allocation2 + $0x40] sm:$0xff]
  %v60 = vld [vmem:[#allocation2 + $0x48] sm:$0xff]
  %v61 = vld [vmem:[#allocation2 + $0x50] sm:$0xff]
  %v62 = vld [vmem:[#allocation2 + $0x58] sm:$0xff]
  %v63 = vld [vmem:[#allocation2 + $0x60] sm:$0xff]
  %v64 = vld [vmem:[#allocation2 + $0x68] sm:$0xff]
  %v65 = vld [vmem:[#allocation2 + $0x70] sm:$0xff]
  %v66 = vld [vmem:[#allocation2 + $0x78] sm:$0xff]
  %v67 = vld [vmem:[#allocation2 + $0x80] sm:$0xff]
  %v68 = vld [vmem:[#allocation2 + $0x88] sm:$0xff]
  %v69 = vld [vmem:[#allocation2 + $0x90] sm:$0xff]
  %v70 = vld [vmem:[#allocation2 + $0x98] sm:$0xff]
  %v71 = vld [vmem:[#allocation2 + $0xa0] sm:$0xff]
  %v72 = vld [vmem:[#allocation2 + $0xa8] sm:$0xff]
  %v73 = vld [vmem:[#allocation2 + $0xb0] sm:$0xff]
  %v74 = vld [vmem:[#allocation2 + $0xb8] sm:$0xff]
  %v75 = vld [vmem:[#allocation2 + $0xc0] sm:$0xff]
  %v76 = vld [vmem:[#allocation2 + $0xc8] sm:$0xff]
  %v77 = vld [vmem:[#allocation2 + $0xd0] sm:$0xff]
  %v78 = vld [vmem:[#allocation2 + $0xd8] sm:$0xff]
  %v79 = vld [vmem:[#allocation2 + $0xe0] sm:$0xff]
  %v80 = vld [vmem:[#allocation2 + $0xe8] sm:$0xff]
  %v81 = vld [vmem:[#allocation2 + $0xf0] sm:$0xff]
  %v82 = vld [vmem:[#allocation2 + $0xf8] sm:$0xff]
  %v83 = vld [vmem:[%s0] sm:$0xf]
  %v84 = vld [vmem:[%s0 + $0x4] sm:$0xf]
  %v85 = vld [vmem:[%s0 + $0x8] sm:$0xf]
  %v86 = vld [vmem:[%s0 + $0xc] sm:$0xf]
  %v87 = vld [vmem:[%s0 + $0x10] sm:$0xf]
  %v88 = vld [vmem:[%s0 + $0x14] sm:$0xf]
  %v89 = vld [vmem:[%s0 + $0x18] sm:$0xf]
  %v90 = vld [vmem:[%s0 + $0x1c] sm:$0xf]
  %v91 = vld [vmem:[%s0 + $0x20] sm:$0xf]
  %v92 = vld [vmem:[%s0 + $0x24] sm:$0xf]
  %v93 = vld [vmem:[%s0 + $0x28] sm:$0xf]
  %v94 = vld [vmem:[%s0 + $0x2c] sm:$0xf]
  %v95 = vld [vmem:[%s0 + $0x30] sm:$0xf]
  %v96 = vld [vmem:[%s0 + $0x34] sm:$0xf]
  %v97 = vld [vmem:[%s0 + $0x38] sm:$0xf]
  %v98 = vld [vmem:[%s0 + $0x3c] sm:$0xf]
  %v99 = vld [vmem:[%s1] sm:$0xff]
  %v100 = vld [vmem:[%s1 + $0x8] sm:$0xff]
  %v101 = vld [vmem:[%s1 + $0x10] sm:$0xff]
  %v102 = vld [vmem:[%s1 + $0x18] sm:$0xff]
  %v103 = vld [vmem:[%s1 + $0x20] sm:$0xff]
  %v104 = vld [vmem:[%s1 + $0x28] sm:$0xff]
  %v105 = vld [vmem:[%s1 + $0x30] sm:$0xff]
  %v106 = vld [vmem:[%s1 + $0x38] sm:$0xff]
  %v107 = vld [vmem:[%s1 + $0x40] sm:$0xff]
  %v108 = vld [vmem:[%s1 + $0x48] sm:$0xff]
  %v109 = vld [vmem:[%s1 + $0x50] sm:$0xff]
  %v110 = vld [vmem:[%s1 + $0x58] sm:$0xff]
  %v111 = vld [vmem:[%s1 + $0x60] sm:$0xff]
  %v112 = vld [vmem:[%s1 + $0x68] sm:$0xff]
  %v113 = vld [vmem:[%s1 + $0x70] sm:$0xff]
  %v114 = vld [vmem:[%s1 + $0x78] sm:$0xff]
  %v131 = vunpack.c.l.b16 %v83
  %v132 = vunpack.c.l.b16 %v84
  %v133 = vunpack.c.l.b16 %v85
  %v134 = vunpack.c.l.b16 %v86
  %v135 = vunpack.c.l.b16 %v87
  %v136 = vunpack.c.l.b16 %v88
  %v137 = vunpack.c.l.b16 %v89
  %v138 = vunpack.c.l.b16 %v90
  %v139 = vunpack.c.l.b16 %v91
  %v140 = vunpack.c.l.b16 %v92
  %v141 = vunpack.c.l.b16 %v93
  %v142 = vunpack.c.l.b16 %v94
  %v143 = vunpack.c.l.b16 %v95
  %v144 = vunpack.c.l.b16 %v96
  %v145 = vunpack.c.l.b16 %v97
  %v146 = vunpack.c.l.b16 %v98
  %v147 = vpack.c.b16 %v132, %v131
  %v148 = vpack.c.b16 %v134, %v133
  %v149 = vpack.c.b16 %v136, %v135
  %v150 = vpack.c.b16 %v138, %v137
  %v151 = vpack.c.b16 %v140, %v139
  %v152 = vpack.c.b16 %v142, %v141
  %v153 = vpack.c.b16 %v144, %v143
  %v154 = vpack.c.b16 %v146, %v145
  %v179 = vunpack.c.l.b16 %v99
  %v180 = vunpack.c.h.b16 %v99
  %v181 = vunpack.c.l.b16 %v100
  %v182 = vunpack.c.h.b16 %v100
  %v183 = vunpack.c.l.b16 %v101
  %v184 = vunpack.c.h.b16 %v101
  %v185 = vunpack.c.l.b16 %v102
  %v186 = vunpack.c.h.b16 %v102
  %v187 = vunpack.c.l.b16 %v103
  %v188 = vunpack.c.h.b16 %v103
  %v189 = vunpack.c.l.b16 %v104
  %v190 = vunpack.c.h.b16 %v104
  %v191 = vunpack.c.l.b16 %v105
  %v192 = vunpack.c.h.b16 %v105
  %v193 = vunpack.c.l.b16 %v106
  %v194 = vunpack.c.h.b16 %v106
  %v195 = vunpack.c.l.b16 %v107
  %v196 = vunpack.c.h.b16 %v107
  %v197 = vunpack.c.l.b16 %v108
  %v198 = vunpack.c.h.b16 %v108
  %v199 = vunpack.c.l.b16 %v109
  %v200 = vunpack.c.h.b16 %v109
  %v201 = vunpack.c.l.b16 %v110
  %v202 = vunpack.c.h.b16 %v110
  %v203 = vunpack.c.l.b16 %v111
  %v204 = vunpack.c.h.b16 %v111
  %v205 = vunpack.c.l.b16 %v112
  %v206 = vunpack.c.h.b16 %v112
  %v207 = vunpack.c.l.b16 %v113
  %v208 = vunpack.c.h.b16 %v113
  %v209 = vunpack.c.l.b16 %v114
  %v210 = vunpack.c.h.b16 %v114
  %v211 = vpack.c.b16 %v181, %v179
  %v212 = vpack.c.b16 %v182, %v180
  %v213 = vpack.c.b16 %v185, %v183
  %v214 = vpack.c.b16 %v186, %v184
  %v215 = vpack.c.b16 %v189, %v187
  %v216 = vpack.c.b16 %v190, %v188
  %v217 = vpack.c.b16 %v193, %v191
  %v218 = vpack.c.b16 %v194, %v192
  %v219 = vpack.c.b16 %v197, %v195
  %v220 = vpack.c.b16 %v198, %v196
  %v221 = vpack.c.b16 %v201, %v199
  %v222 = vpack.c.b16 %v202, %v200
  %v223 = vpack.c.b16 %v205, %v203
  %v224 = vpack.c.b16 %v206, %v204
  %v225 = vpack.c.b16 %v209, %v207
  %v226 = vpack.c.b16 %v210, %v208
  %243 = vmatprep.subr.bf16.mxu0 %v212
  %244 = vmatpush1.bf16.msra.mxu0 %v211
  %245 = vmatprep.subr.bf16.mxu0 %v214
  %246 = vmatpush1.bf16.msra.mxu0 %v213
  %247 = vmatprep.subr.bf16.mxu0 %v216
  %248 = vmatpush1.bf16.msra.mxu0 %v215
  %249 = vmatprep.subr.bf16.mxu0 %v218
  %250 = vmatpush1.bf16.msra.mxu0 %v217
  %251 = vmatprep.subr.bf16.mxu0 %v220
  %252 = vmatpush1.bf16.msra.mxu0 %v219
  %253 = vmatprep.subr.bf16.mxu0 %v222
  %254 = vmatpush1.bf16.msra.mxu0 %v221
  %255 = vmatprep.subr.bf16.mxu0 %v224
  %256 = vmatpush1.bf16.msra.mxu0 %v223
  %257 = vmatprep.subr.bf16.mxu0 %v226
  %258 = vmatpush1.bf16.msra.mxu0 %v225
  %259 = vmatprep.subr.bf16.mxu0 0
  %260 = vmatpush1.bf16.msra.mxu0 0
  %261 = vmatprep.subr.bf16.mxu0 0
  %262 = vmatpush1.bf16.msra.mxu0 0
  %263 = vmatprep.subr.bf16.mxu0 0
  %264 = vmatpush1.bf16.msra.mxu0 0
  %265 = vmatprep.subr.bf16.mxu0 0
  %266 = vmatpush1.bf16.msra.mxu0 0
  %267 = vmatprep.subr.bf16.mxu0 0
  %268 = vmatpush1.bf16.msra.mxu0 0
  %269 = vmatprep.subr.bf16.mxu0 0
  %270 = vmatpush1.bf16.msra.mxu0 0
  %271 = vmatprep.subr.bf16.mxu0 0
  %272 = vmatpush1.bf16.msra.mxu0 0
  %273 = vmatprep.subr.bf16.mxu0 0
  %274 = vmatpush1.bf16.msra.mxu0 0
  %275 = vmatprep.mubr.bf16.mxu0 0
  %276 = vmatmul.mubr.bf16.gmra.mrb[0].mxu0 %v147
  %v277 = vpop.f32.mrb[0].mxu0
  %v278 = vadd.f32 0.0, %v277
  %v279 = vpop.f32.mrb[0].mxu0
  %v280 = vadd.f32 0.0, %v279
  %v281 = vpop.f32.mrb[0].mxu0
  %v282 = vadd.f32 0.0, %v281
  %v283 = vpop.f32.mrb[0].mxu0
  %v284 = vadd.f32 0.0, %v283
  %285 = vmatprep.mubr.bf16.mxu0 0
  %286 = vmatmul.mubr.bf16.gmra.mrb[0].mxu0 %v148
  %v287 = vpop.f32.mrb[0].mxu0
  %v288 = vadd.f32 0.0, %v287
  %v289 = vpop.f32.mrb[0].mxu0
  %v290 = vadd.f32 0.0, %v289
  %v291 = vpop.f32.mrb[0].mxu0
  %v292 = vadd.f32 0.0, %v291
  %v293 = vpop.f32.mrb[0].mxu0
  %v294 = vadd.f32 0.0, %v293
  %295 = vmatprep.mubr.bf16.mxu0 0
  %296 = vmatmul.mubr.bf16.gmra.mrb[0].mxu0 %v149
  %v297 = vpop.f32.mrb[0].mxu0
  %v298 = vadd.f32 0.0, %v297
  %v299 = vpop.f32.mrb[0].mxu0
  %v300 = vadd.f32 0.0, %v299
  %v301 = vpop.f32.mrb[0].mxu0
  %v302 = vadd.f32 0.0, %v301
  %v303 = vpop.f32.mrb[0].mxu0
  %v304 = vadd.f32 0.0, %v303
  %305 = vmatprep.mubr.bf16.mxu0 0
  %306 = vmatmul.mubr.bf16.gmra.mrb[0].mxu0 %v150
  %v307 = vpop.f32.mrb[0].mxu0
  %v308 = vadd.f32 0.0, %v307
  %v309 = vpop.f32.mrb[0].mxu0
  %v310 = vadd.f32 0.0, %v309
  %v311 = vpop.f32.mrb[0].mxu0
  %v312 = vadd.f32 0.0, %v311
  %v313 = vpop.f32.mrb[0].mxu0
  %v314 = vadd.f32 0.0, %v313
  %315 = vmatprep.mubr.bf16.mxu0 0
  %316 = vmatmul.mubr.bf16.gmra.mrb[0].mxu0 %v151
  %v317 = vpop.f32.mrb[0].mxu0
  %v318 = vadd.f32 0.0, %v317
  %v319 = vpop.f32.mrb[0].mxu0
  %v320 = vadd.f32 0.0, %v319
  %v321 = vpop.f32.mrb[0].mxu0
  %v322 = vadd.f32 0.0, %v321
  %v323 = vpop.f32.mrb[0].mxu0
  %v324 = vadd.f32 0.0, %v323
  %325 = vmatprep.mubr.bf16.mxu0 0
  %326 = vmatmul.mubr.bf16.gmra.mrb[0].mxu0 %v152
  %v327 = vpop.f32.mrb[0].mxu0
  %v328 = vadd.f32 0.0, %v327
  %v329 = vpop.f32.mrb[0].mxu0
  %v330 = vadd.f32 0.0, %v329
  %v331 = vpop.f32.mrb[0].mxu0
  %v332 = vadd.f32 0.0, %v331
  %v333 = vpop.f32.mrb[0].mxu0
  %v334 = vadd.f32 0.0, %v333
  %335 = vmatprep.mubr.bf16.mxu0 0
  %336 = vmatmul.mubr.bf16.gmra.mrb[0].mxu0 %v153
  %v337 = vpop.f32.mrb[0].mxu0
  %v338 = vadd.f32 0.0, %v337
  %v339 = vpop.f32.mrb[0].mxu0
  %v340 = vadd.f32 0.0, %v339
  %v341 = vpop.f32.mrb[0].mxu0
  %v342 = vadd.f32 0.0, %v341
  %v343 = vpop.f32.mrb[0].mxu0
  %v344 = vadd.f32 0.0, %v343
  %345 = vmatprep.mubr.bf16.mxu0 0
  %346 = vmatmul.mubr.bf16.gmra.mrb[0].mxu0 %v154
  %v347 = vpop.f32.mrb[0].mxu0
  %v348 = vadd.f32 0.0, %v347
  %v349 = vpop.f32.mrb[0].mxu0
  %v350 = vadd.f32 0.0, %v349
  %v351 = vpop.f32.mrb[0].mxu0
  %v352 = vadd.f32 0.0, %v351
  %v353 = vpop.f32.mrb[0].mxu0
  %v354 = vadd.f32 0.0, %v353
  %355 = vdwg.mxu0
  %v356 = vadd.f32 %v51, %v278
  %v357 = vadd.f32 %v52, %v280
  %v358 = vadd.f32 %v53, %v282
  %v359 = vadd.f32 %v54, %v284
  %v360 = vadd.f32 %v55, %v288
  %v361 = vadd.f32 %v56, %v290
  %v362 = vadd.f32 %v57, %v292
  %v363 = vadd.f32 %v58, %v294
  %v364 = vadd.f32 %v59, %v298
  %v365 = vadd.f32 %v60, %v300
  %v366 = vadd.f32 %v61, %v302
  %v367 = vadd.f32 %v62, %v304
  %v368 = vadd.f32 %v63, %v308
  %v369 = vadd.f32 %v64, %v310
  %v370 = vadd.f32 %v65, %v312
  %v371 = vadd.f32 %v66, %v314
  %v372 = vadd.f32 %v67, %v318
  %v373 = vadd.f32 %v68, %v320
  %v374 = vadd.f32 %v69, %v322
  %v375 = vadd.f32 %v70, %v324
  %v376 = vadd.f32 %v71, %v328
  %v377 = vadd.f32 %v72, %v330
  %v378 = vadd.f32 %v73, %v332
  %v379 = vadd.f32 %v74, %v334
  %v380 = vadd.f32 %v75, %v338
  %v381 = vadd.f32 %v76, %v340
  %v382 = vadd.f32 %v77, %v342
  %v383 = vadd.f32 %v78, %v344
  %v384 = vadd.f32 %v79, %v348
  %v385 = vadd.f32 %v80, %v350
  %v386 = vadd.f32 %v81, %v352
  %v387 = vadd.f32 %v82, %v354
  %388 = vst [vmem:[#allocation2] sm:$0xff] %v356
  %389 = vst [vmem:[#allocation2 + $0x8] sm:$0xff] %v357
  %390 = vst [vmem:[#allocation2 + $0x10] sm:$0xff] %v358
  %391 = vst [vmem:[#allocation2 + $0x18] sm:$0xff] %v359
  %392 = vst [vmem:[#allocation2 + $0x20] sm:$0xff] %v360
  %393 = vst [vmem:[#allocation2 + $0x28] sm:$0xff] %v361
  %394 = vst [vmem:[#allocation2 + $0x30] sm:$0xff] %v362
  %395 = vst [vmem:[#allocation2 + $0x38] sm:$0xff] %v363
  %396 = vst [vmem:[#allocation2 + $0x40] sm:$0xff] %v364
  %397 = vst [vmem:[#allocation2 + $0x48] sm:$0xff] %v365
  %398 = vst [vmem:[#allocation2 + $0x50] sm:$0xff] %v366
  %399 = vst [vmem:[#allocation2 + $0x58] sm:$0xff] %v367
  %400 = vst [vmem:[#allocation2 + $0x60] sm:$0xff] %v368
  %401 = vst [vmem:[#allocation2 + $0x68] sm:$0xff] %v369
  %402 = vst [vmem:[#allocation2 + $0x70] sm:$0xff] %v370
  %403 = vst [vmem:[#allocation2 + $0x78] sm:$0xff] %v371
  %404 = vst [vmem:[#allocation2 + $0x80] sm:$0xff] %v372
  %405 = vst [vmem:[#allocation2 + $0x88] sm:$0xff] %v373
  %406 = vst [vmem:[#allocation2 + $0x90] sm:$0xff] %v374
  %407 = vst [vmem:[#allocation2 + $0x98] sm:$0xff] %v375
  %408 = vst [vmem:[#allocation2 + $0xa0] sm:$0xff] %v376
  %409 = vst [vmem:[#allocation2 + $0xa8] sm:$0xff] %v377
  %410 = vst [vmem:[#allocation2 + $0xb0] sm:$0xff] %v378
  %411 = vst [vmem:[#allocation2 + $0xb8] sm:$0xff] %v379
  %412 = vst [vmem:[#allocation2 + $0xc0] sm:$0xff] %v380
  %413 = vst [vmem:[#allocation2 + $0xc8] sm:$0xff] %v381
  %414 = vst [vmem:[#allocation2 + $0xd0] sm:$0xff] %v382
  %415 = vst [vmem:[#allocation2 + $0xd8] sm:$0xff] %v383
  %416 = vst [vmem:[#allocation2 + $0xe0] sm:$0xff] %v384
  %417 = vst [vmem:[#allocation2 + $0xe8] sm:$0xff] %v385
  %418 = vst [vmem:[#allocation2 + $0xf0] sm:$0xff] %v386
  %419 = vst [vmem:[#allocation2 + $0xf8] sm:$0xff] %v387
  // Predicated region
  $region14: #{_lambda_.4} parent=0 // pred_check
    %p420 = pneg %p15
  $region15: #{_lambda_.4} parent=0 // pred_check_branch
    %422 = sbr.rel (%p420) target = $region17
  $region16: #{_lambda_.4} parent=0 // pred_region
    %v423 = vld [vmem:[#allocation2] sm:$0xff]
    %v424 = vld [vmem:[#allocation2 + $0x8] sm:$0xff]
    %v425 = vld [vmem:[#allocation2 + $0x10] sm:$0xff]
    %v426 = vld [vmem:[#allocation2 + $0x18] sm:$0xff]
    %v427 = vld [vmem:[#allocation2 + $0x20] sm:$0xff]
    %v428 = vld [vmem:[#allocation2 + $0x28] sm:$0xff]
    %v429 = vld [vmem:[#allocation2 + $0x30] sm:$0xff]
    %v430 = vld [vmem:[#allocation2 + $0x38] sm:$0xff]
    %v431 = vld [vmem:[#allocation2 + $0x40] sm:$0xff]
    %v432 = vld [vmem:[#allocation2 + $0x48] sm:$0xff]
    %v433 = vld [vmem:[#allocation2 + $0x50] sm:$0xff]
    %v434 = vld [vmem:[#allocation2 + $0x58] sm:$0xff]
    %v435 = vld [vmem:[#allocation2 + $0x60] sm:$0xff]
    %v436 = vld [vmem:[#allocation2 + $0x68] sm:$0xff]
    %v437 = vld [vmem:[#allocation2 + $0x70] sm:$0xff]
    %v438 = vld [vmem:[#allocation2 + $0x78] sm:$0xff]
    %v439 = vld [vmem:[#allocation2 + $0x80] sm:$0xff]
    %v440 = vld [vmem:[#allocation2 + $0x88] sm:$0xff]
    %v441 = vld [vmem:[#allocation2 + $0x90] sm:$0xff]
    %v442 = vld [vmem:[#allocation2 + $0x98] sm:$0xff]
    %v443 = vld [vmem:[#allocation2 + $0xa0] sm:$0xff]
    %v444 = vld [vmem:[#allocation2 + $0xa8] sm:$0xff]
    %v445 = vld [vmem:[#allocation2 + $0xb0] sm:$0xff]
    %v446 = vld [vmem:[#allocation2 + $0xb8] sm:$0xff]
    %v447 = vld [vmem:[#allocation2 + $0xc0] sm:$0xff]
    %v448 = vld [vmem:[#allocation2 + $0xc8] sm:$0xff]
    %v449 = vld [vmem:[#allocation2 + $0xd0] sm:$0xff]
    %v450 = vld [vmem:[#allocation2 + $0xd8] sm:$0xff]
    %v451 = vld [vmem:[#allocation2 + $0xe0] sm:$0xff]
    %v452 = vld [vmem:[#allocation2 + $0xe8] sm:$0xff]
    %v453 = vld [vmem:[#allocation2 + $0xf0] sm:$0xff]
    %v454 = vld [vmem:[#allocation2 + $0xf8] sm:$0xff]
    %v455 = vpack.c.bf16 %v425, %v423
    %v456 = vpack.c.bf16 %v426, %v424
    %v457 = vpack.c.bf16 %v429, %v427
    %v458 = vpack.c.bf16 %v430, %v428
    %v459 = vpack.c.bf16 %v433, %v431
    %v460 = vpack.c.bf16 %v434, %v432
    %v461 = vpack.c.bf16 %v437, %v435
    %v462 = vpack.c.bf16 %v438, %v436
    %v463 = vpack.c.bf16 %v441, %v439
    %v464 = vpack.c.bf16 %v442, %v440
    %v465 = vpack.c.bf16 %v445, %v443
    %v466 = vpack.c.bf16 %v446, %v444
    %v467 = vpack.c.bf16 %v449, %v447
    %v468 = vpack.c.bf16 %v450, %v448
    %v469 = vpack.c.bf16 %v453, %v451
    %v470 = vpack.c.bf16 %v454, %v452
    %v487 = vunpack.c.l.b16 %v455
    %v488 = vunpack.c.l.b16 %v456
    %v489 = vunpack.c.h.b16 %v455
    %v490 = vunpack.c.h.b16 %v456
    %v491 = vunpack.c.l.b16 %v457
    %v492 = vunpack.c.l.b16 %v458
    %v493 = vunpack.c.h.b16 %v457
    %v494 = vunpack.c.h.b16 %v458
    %v495 = vunpack.c.l.b16 %v459
    %v496 = vunpack.c.l.b16 %v460
    %v497 = vunpack.c.h.b16 %v459
    %v498 = vunpack.c.h.b16 %v460
    %v499 = vunpack.c.l.b16 %v461
    %v500 = vunpack.c.l.b16 %v462
    %v501 = vunpack.c.h.b16 %v461
    %v502 = vunpack.c.h.b16 %v462
    %v503 = vunpack.c.l.b16 %v463
    %v504 = vunpack.c.l.b16 %v464
    %v505 = vunpack.c.h.b16 %v463
    %v506 = vunpack.c.h.b16 %v464
    %v507 = vunpack.c.l.b16 %v465
    %v508 = vunpack.c.l.b16 %v466
    %v509 = vunpack.c.h.b16 %v465
    %v510 = vunpack.c.h.b16 %v466
    %v511 = vunpack.c.l.b16 %v467
    %v512 = vunpack.c.l.b16 %v468
    %v513 = vunpack.c.h.b16 %v467
    %v514 = vunpack.c.h.b16 %v468
    %v515 = vunpack.c.l.b16 %v469
    %v516 = vunpack.c.l.b16 %v470
    %v517 = vunpack.c.h.b16 %v469
    %v518 = vunpack.c.h.b16 %v470
    %v519 = vpack.c.b16 %v488, %v487
    %v520 = vpack.c.b16 %v490, %v489
    %v521 = vpack.c.b16 %v492, %v491
    %v522 = vpack.c.b16 %v494, %v493
    %v523 = vpack.c.b16 %v496, %v495
    %v524 = vpack.c.b16 %v498, %v497
    %v525 = vpack.c.b16 %v500, %v499
    %v526 = vpack.c.b16 %v502, %v501
    %v527 = vpack.c.b16 %v504, %v503
    %v528 = vpack.c.b16 %v506, %v505
    %v529 = vpack.c.b16 %v508, %v507
    %v530 = vpack.c.b16 %v510, %v509
    %v531 = vpack.c.b16 %v512, %v511
    %v532 = vpack.c.b16 %v514, %v513
    %v533 = vpack.c.b16 %v516, %v515
    %v534 = vpack.c.b16 %v518, %v517
    %551 = vst [vmem:[%s2] sm:$0xff] %v519
    %552 = vst [vmem:[%s2 + $0x8] sm:$0xff] %v520
    %553 = vst [vmem:[%s2 + $0x10] sm:$0xff] %v521
    %554 = vst [vmem:[%s2 + $0x18] sm:$0xff] %v522
    %555 = vst [vmem:[%s2 + $0x20] sm:$0xff] %v523
    %556 = vst [vmem:[%s2 + $0x28] sm:$0xff] %v524
    %557 = vst [vmem:[%s2 + $0x30] sm:$0xff] %v525
    %558 = vst [vmem:[%s2 + $0x38] sm:$0xff] %v526
    %559 = vst [vmem:[%s2 + $0x40] sm:$0xff] %v527
    %560 = vst [vmem:[%s2 + $0x48] sm:$0xff] %v528
    %561 = vst [vmem:[%s2 + $0x50] sm:$0xff] %v529
    %562 = vst [vmem:[%s2 + $0x58] sm:$0xff] %v530
    %563 = vst [vmem:[%s2 + $0x60] sm:$0xff] %v531
    %564 = vst [vmem:[%s2 + $0x68] sm:$0xff] %v532
    %565 = vst [vmem:[%s2 + $0x70] sm:$0xff] %v533
    %566 = vst [vmem:[%s2 + $0x78] sm:$0xff] %v534
    %v567 = vadd.f32 %v423, %v425
    %v568 = vadd.f32 %v567, %v427
    %v569 = vadd.f32 %v568, %v429
    %v570 = vadd.f32 %v569, %v431
    %v571 = vadd.f32 %v570, %v433
    %v572 = vadd.f32 %v571, %v435
    %v573 = vadd.f32 %v572, %v437
    %v574 = vadd.f32 %v573, %v439
    %v575 = vadd.f32 %v574, %v441
    %v576 = vadd.f32 %v575, %v443
    %v577 = vadd.f32 %v576, %v445
    %v578 = vadd.f32 %v577, %v447
    %v579 = vadd.f32 %v578, %v449
    %v580 = vadd.f32 %v579, %v451
    %v581 = vadd.f32 %v580, %v453
    %v582 = vrot.slane %v581, 4
    %v583 = vadd.f32 %v581, %v582
    %v584 = vrot.slane %v583, 2
    %v585 = vadd.f32 %v583, %v584
    %v586 = vrot.slane %v585, 1
    %v587 = vadd.f32 %v585, %v586
    %v588 = vadd.f32 %v424, %v426
    %v589 = vadd.f32 %v588, %v428
    %v590 = vadd.f32 %v589, %v430
    %v591 = vadd.f32 %v590, %v432
    %v592 = vadd.f32 %v591, %v434
    %v593 = vadd.f32 %v592, %v436
    %v594 = vadd.f32 %v593, %v438
    %v595 = vadd.f32 %v594, %v440
    %v596 = vadd.f32 %v595, %v442
    %v597 = vadd.f32 %v596, %v444
    %v598 = vadd.f32 %v597, %v446
    %v599 = vadd.f32 %v598, %v448
    %v600 = vadd.f32 %v599, %v450
    %v601 = vadd.f32 %v600, %v452
    %v602 = vadd.f32 %v601, %v454
    %v603 = vrot.slane %v602, 4
    %v604 = vadd.f32 %v602, %v603
    %v605 = vrot.slane %v604, 2
    %v606 = vadd.f32 %v604, %v605
    %v607 = vrot.slane %v606, 1
    %v608 = vadd.f32 %v606, %v607
    %v611 = vcombine.low %v587, %v608
    %v613 = vunpack.c.l.s4 1966171168
    %v614 = vunpack.c.0.s8 %v613
    %v615 = vlaneseq
    %v616 = vshrl.u32 %v615, 7
    %v617 = vsub.s32 %v614, %v616
    %v618 = vrot.slane %v611, %v617
    %v620 = vunpack.c.l.s4 1966171168
    %v621 = vunpack.c.0.s8 %v620
    %v622 = vlaneseq
    %v623 = vshrl.u32 %v622, 7
    %v624 = vsub.s32 %v621, %v623
    %v625 = vrot.slane %v618, %v624
    %v627 = vlaneseq
    %vm628 = vcmp.ge.s32.totalorder %v627, 0
    %vm629 = vcmp.lt.s32.totalorder %v627, 256
    %vm630 = vmand %vm628, %vm629
    %631 = vst.msk [vmem:[%s3] sm:$0x3] %vm630, %v625
    %v632 = vmul.f32 %v423, %v423
    %v633 = vmul.f32 %v424, %v424
    %v634 = vmul.f32 %v425, %v425
    %v635 = vmul.f32 %v426, %v426
    %v636 = vmul.f32 %v427, %v427
    %v637 = vmul.f32 %v428, %v428
    %v638 = vmul.f32 %v429, %v429
    %v639 = vmul.f32 %v430, %v430
    %v640 = vmul.f32 %v431, %v431
    %v641 = vmul.f32 %v432, %v432
    %v642 = vmul.f32 %v433, %v433
    %v643 = vmul.f32 %v434, %v434
    %v644 = vmul.f32 %v435, %v435
    %v645 = vmul.f32 %v436, %v436
    %v646 = vmul.f32 %v437, %v437
    %v647 = vmul.f32 %v438, %v438
    %v648 = vmul.f32 %v439, %v439
    %v649 = vmul.f32 %v440, %v440
    %v650 = vmul.f32 %v441, %v441
    %v651 = vmul.f32 %v442, %v442
    %v652 = vmul.f32 %v443, %v443
    %v653 = vmul.f32 %v444, %v444
    %v654 = vmul.f32 %v445, %v445
    %v655 = vmul.f32 %v446, %v446
    %v656 = vmul.f32 %v447, %v447
    %v657 = vmul.f32 %v448, %v448
    %v658 = vmul.f32 %v449, %v449
    %v659 = vmul.f32 %v450, %v450
    %v660 = vmul.f32 %v451, %v451
    %v661 = vmul.f32 %v452, %v452
    %v662 = vmul.f32 %v453, %v453
    %v663 = vmul.f32 %v454, %v454
    %v664 = vadd.f32 %v632, %v634
    %v665 = vadd.f32 %v664, %v636
    %v666 = vadd.f32 %v665, %v638
    %v667 = vadd.f32 %v666, %v640
    %v668 = vadd.f32 %v667, %v642
    %v669 = vadd.f32 %v668, %v644
    %v670 = vadd.f32 %v669, %v646
    %v671 = vadd.f32 %v670, %v648
    %v672 = vadd.f32 %v671, %v650
    %v673 = vadd.f32 %v672, %v652
    %v674 = vadd.f32 %v673, %v654
    %v675 = vadd.f32 %v674, %v656
    %v676 = vadd.f32 %v675, %v658
    %v677 = vadd.f32 %v676, %v660
    %v678 = vadd.f32 %v677, %v662
    %v679 = vrot.slane %v678, 4
    %v680 = vadd.f32 %v678, %v679
    %v681 = vrot.slane %v680, 2
    %v682 = vadd.f32 %v680, %v681
    %v683 = vrot.slane %v682, 1
    %v684 = vadd.f32 %v682, %v683
    %v685 = vadd.f32 %v633, %v635
    %v686 = vadd.f32 %v685, %v637
    %v687 = vadd.f32 %v686, %v639
    %v688 = vadd.f32 %v687, %v641
    %v689 = vadd.f32 %v688, %v643
    %v690 = vadd.f32 %v689, %v645
    %v691 = vadd.f32 %v690, %v647
    %v692 = vadd.f32 %v691, %v649
    %v693 = vadd.f32 %v692, %v651
    %v694 = vadd.f32 %v693, %v653
    %v695 = vadd.f32 %v694, %v655
    %v696 = vadd.f32 %v695, %v657
    %v697 = vadd.f32 %v696, %v659
    %v698 = vadd.f32 %v697, %v661
    %v699 = vadd.f32 %v698, %v663
    %v700 = vrot.slane %v699, 4
    %v701 = vadd.f32 %v699, %v700
    %v702 = vrot.slane %v701, 2
    %v703 = vadd.f32 %v701, %v702
    %v704 = vrot.slane %v703, 1
    %v705 = vadd.f32 %v703, %v704
    %v708 = vcombine.low %v684, %v705
    %v710 = vunpack.c.l.s4 1966171168
    %v711 = vunpack.c.0.s8 %v710
    %v712 = vlaneseq
    %v713 = vshrl.u32 %v712, 7
    %v714 = vsub.s32 %v711, %v713
    %v715 = vrot.slane %v708, %v714
    %v717 = vunpack.c.l.s4 1966171168
    %v718 = vunpack.c.0.s8 %v717
    %v719 = vlaneseq
    %v720 = vshrl.u32 %v719, 7
    %v721 = vsub.s32 %v718, %v720
    %v722 = vrot.slane %v715, %v721
    %724 = vst.msk [vmem:[%s4] sm:$0x3] %vm630, %v722
  $region17: #{_lambda_.4} parent=0 // pred_fallthru
    _
  // Predicated region
  $region18: #{_lambda_.4} parent=0 // pred_check
    _
  $region19: #{_lambda_.4} parent=0 // pred_check_branch
    %726 = sbr.rel (0) target = $region21
  $region20: #{_lambda_.4} parent=0 // pred_region
    _
  $region21: #{_lambda_.4} parent=0 // pred_fallthru
    _
  // Predicated region
  $region22: #{_lambda_.4} parent=0 // pred_check
    _
  $region23: #{_lambda_.4} parent=0 // pred_check_branch
    %728 = sbr.rel (0) target = $region25
  $region24: #{_lambda_.4} parent=0 // pred_region
    _
  $region25: #{_lambda_.4} parent=0 // pred_fallthru
    _
  // Predicated region
  $region26: #{_lambda_.4} parent=0 // pred_check
    _
  $region27: #{_lambda_.4} parent=0 // pred_check_branch
    %730 = sbr.rel (0) target = $region29
  $region28: #{_lambda_.4} parent=0 // pred_region
    _
  $region29: #{_lambda_.4} parent=0 // pred_fallthru
    _
  // Predicated region
  $region30: #{_lambda_.4} parent=0 // pred_check
    _
  $region31: #{_lambda_.4} parent=0 // pred_check_branch
    %732 = sbr.rel (0) target = $region33
  $region32: #{_lambda_.4} parent=0 // pred_region
    _
  $region33: #{_lambda_.4} parent=0 // pred_fallthru
    _
  // Predicated region
  $region34: #{_lambda_.4} parent=0 // pred_check
    _
  $region35: #{_lambda_.4} parent=0 // pred_check_branch
    %734 = sbr.rel (0) target = $region37
  $region36: #{_lambda_.4} parent=0 // pred_region
    _
  $region37: #{_lambda_.4} parent=0 // pred_fallthru
    _
  // Predicated region
  $region38: #{_lambda_.4} parent=0 // pred_check
    _
  $region39: #{_lambda_.4} parent=0 // pred_check_branch
    %736 = sbr.rel (0) target = $region41
  $region40: #{_lambda_.4} parent=0 // pred_region
    _
  $region41: #{_lambda_.4} parent=0 // pred_fallthru
    _

// kernel: _lambda_.6
$region0: #{_lambda_.6}
  #allocation0 [shape = 'u32[]', space=smem, size = 0x4, offset = 0x4, fixed_abs, tag = 'smem constant byte address 0x4 - core index']
  #allocation1 [shape = 'u32[144,128]{1,0:T(1,128)}', space=vmem, size = 0x12000, scoped, tag = 'internal scratch']
  #allocation2 [shape = 'f32[128,128]{1,0:T(8,128)}', space=vmem, size = 0x10000, scoped, tag = 'scratch operand']
  %s0 = inlined_call_operand.vmem [shape: bf16[128,128], index: 0, kind: input, shape index: {}]
  %s1 = inlined_call_operand.vmem [shape: bf16[128,128], index: 1, kind: input, shape index: {}]
  %s2 = inlined_call_operand.vmem [shape: bf16[128,128], index: 2, kind: output, shape index: {0}]
  %s3 = inlined_call_operand.vmem [shape: f32[1,1,128], index: 3, kind: output, shape index: {1}]
  %s4 = inlined_call_operand.vmem [shape: f32[1,1,128], index: 4, kind: output, shape index: {2}]
  %5 = xla_tuple %s2, %s3, %s4
  %s6 = sld [smem:[#allocation0]]
  $region42: #{_lambda_.6} parent=0
    _
  %s8 = ssub.s32 1, %s6
  %s9 = scalar_select 0, %s8, %s6
  // Predicated region
  $region2: #{_lambda_.6} parent=0 // pred_check
    _
  $region3: #{_lambda_.6} parent=0 // pred_check_branch
    %11 = sbr.rel (0) target = $region5
  $region4: #{_lambda_.6} parent=0 // pred_region
    _
  $region5: #{_lambda_.6} parent=0 // pred_fallthru
    _
  // Predicated region
  $region6: #{_lambda_.6} parent=0 // pred_check
    _
  $region7: #{_lambda_.6} parent=0 // pred_check_branch
    %13 = sbr.rel (0) target = $region9
  $region8: #{_lambda_.6} parent=0 // pred_region
    _
  $region9: #{_lambda_.6} parent=0 // pred_fallthru
    _
  %p15 = scmp.eq.s32.totalorder 0, 0
  // Predicated region
  $region10: #{_lambda_.6} parent=0 // pred_check
    %p16 = pneg %p15
  $region11: #{_lambda_.6} parent=0 // pred_check_branch
    %18 = sbr.rel (%p16) target = $region13
  $region12: #{_lambda_.6} parent=0 // pred_region
    %19 = vst [vmem:[#allocation2] sm:$0xff] 0.0
    %20 = vst [vmem:[#allocation2 + $0x8] sm:$0xff] 0.0
    %21 = vst [vmem:[#allocation2 + $0x10] sm:$0xff] 0.0
    %22 = vst [vmem:[#allocation2 + $0x18] sm:$0xff] 0.0
    %23 = vst [vmem:[#allocation2 + $0x20] sm:$0xff] 0.0
    %24 = vst [vmem:[#allocation2 + $0x28] sm:$0xff] 0.0
    %25 = vst [vmem:[#allocation2 + $0x30] sm:$0xff] 0.0
    %26 = vst [vmem:[#allocation2 + $0x38] sm:$0xff] 0.0
    %27 = vst [vmem:[#allocation2 + $0x40] sm:$0xff] 0.0
    %28 = vst [vmem:[#allocation2 + $0x48] sm:$0xff] 0.0
    %29 = vst [vmem:[#allocation2 + $0x50] sm:$0xff] 0.0
    %30 = vst [vmem:[#allocation2 + $0x58] sm:$0xff] 0.0
    %31 = vst [vmem:[#allocation2 + $0x60] sm:$0xff] 0.0
    %32 = vst [vmem:[#allocation2 + $0x68] sm:$0xff] 0.0
    %33 = vst [vmem:[#allocation2 + $0x70] sm:$0xff] 0.0
    %34 = vst [vmem:[#allocation2 + $0x78] sm:$0xff] 0.0
  $region13: #{_lambda_.6} parent=0 // pred_fallthru
    _
  %v35 = vld [vmem:[#allocation2] sm:$0xff]
  %v36 = vld [vmem:[#allocation2 + $0x8] sm:$0xff]
  %v37 = vld [vmem:[#allocation2 + $0x10] sm:$0xff]
  %v38 = vld [vmem:[#allocation2 + $0x18] sm:$0xff]
  %v39 = vld [vmem:[#allocation2 + $0x20] sm:$0xff]
  %v40 = vld [vmem:[#allocation2 + $0x28] sm:$0xff]
  %v41 = vld [vmem:[#allocation2 + $0x30] sm:$0xff]
  %v42 = vld [vmem:[#allocation2 + $0x38] sm:$0xff]
  %v43 = vld [vmem:[#allocation2 + $0x40] sm:$0xff]
  %v44 = vld [vmem:[#allocation2 + $0x48] sm:$0xff]
  %v45 = vld [vmem:[#allocation2 + $0x50] sm:$0xff]
  %v46 = vld [vmem:[#allocation2 + $0x58] sm:$0xff]
  %v47 = vld [vmem:[#allocation2 + $0x60] sm:$0xff]
  %v48 = vld [vmem:[#allocation2 + $0x68] sm:$0xff]
  %v49 = vld [vmem:[#allocation2 + $0x70] sm:$0xff]
  %v50 = vld [vmem:[#allocation2 + $0x78] sm:$0xff]
  %v51 = vld [vmem:[%s0] sm:$0xf]
  %v52 = vld [vmem:[%s0 + $0x4] sm:$0xf]
  %v53 = vld [vmem:[%s0 + $0x8] sm:$0xf]
  %v54 = vld [vmem:[%s0 + $0xc] sm:$0xf]
  %v55 = vld [vmem:[%s0 + $0x10] sm:$0xf]
  %v56 = vld [vmem:[%s0 + $0x14] sm:$0xf]
  %v57 = vld [vmem:[%s0 + $0x18] sm:$0xf]
  %v58 = vld [vmem:[%s0 + $0x1c] sm:$0xf]
  %v59 = vld [vmem:[%s0 + $0x20] sm:$0xf]
  %v60 = vld [vmem:[%s0 + $0x24] sm:$0xf]
  %v61 = vld [vmem:[%s0 + $0x28] sm:$0xf]
  %v62 = vld [vmem:[%s0 + $0x2c] sm:$0xf]
  %v63 = vld [vmem:[%s0 + $0x30] sm:$0xf]
  %v64 = vld [vmem:[%s0 + $0x34] sm:$0xf]
  %v65 = vld [vmem:[%s0 + $0x38] sm:$0xf]
  %v66 = vld [vmem:[%s0 + $0x3c] sm:$0xf]
  %v67 = vld [vmem:[%s1] sm:$0xf]
  %v68 = vld [vmem:[%s1 + $0x4] sm:$0xf]
  %v69 = vld [vmem:[%s1 + $0x8] sm:$0xf]
  %v70 = vld [vmem:[%s1 + $0xc] sm:$0xf]
  %v71 = vld [vmem:[%s1 + $0x10] sm:$0xf]
  %v72 = vld [vmem:[%s1 + $0x14] sm:$0xf]
  %v73 = vld [vmem:[%s1 + $0x18] sm:$0xf]
  %v74 = vld [vmem:[%s1 + $0x1c] sm:$0xf]
  %v75 = vld [vmem:[%s1 + $0x20] sm:$0xf]
  %v76 = vld [vmem:[%s1 + $0x24] sm:$0xf]
  %v77 = vld [vmem:[%s1 + $0x28] sm:$0xf]
  %v78 = vld [vmem:[%s1 + $0x2c] sm:$0xf]
  %v79 = vld [vmem:[%s1 + $0x30] sm:$0xf]
  %v80 = vld [vmem:[%s1 + $0x34] sm:$0xf]
  %v81 = vld [vmem:[%s1 + $0x38] sm:$0xf]
  %v82 = vld [vmem:[%s1 + $0x3c] sm:$0xf]
  %v99 = vunpack.c.l.b16 %v51
  %v100 = vunpack.c.l.b16 %v52
  %v101 = vunpack.c.l.b16 %v53
  %v102 = vunpack.c.l.b16 %v54
  %v103 = vunpack.c.l.b16 %v55
  %v104 = vunpack.c.l.b16 %v56
  %v105 = vunpack.c.l.b16 %v57
  %v106 = vunpack.c.l.b16 %v58
  %v107 = vunpack.c.l.b16 %v59
  %v108 = vunpack.c.l.b16 %v60
  %v109 = vunpack.c.l.b16 %v61
  %v110 = vunpack.c.l.b16 %v62
  %v111 = vunpack.c.l.b16 %v63
  %v112 = vunpack.c.l.b16 %v64
  %v113 = vunpack.c.l.b16 %v65
  %v114 = vunpack.c.l.b16 %v66
  %v115 = vpack.c.b16 %v100, %v99
  %v116 = vpack.c.b16 %v102, %v101
  %v117 = vpack.c.b16 %v104, %v103
  %v118 = vpack.c.b16 %v106, %v105
  %v119 = vpack.c.b16 %v108, %v107
  %v120 = vpack.c.b16 %v110, %v109
  %v121 = vpack.c.b16 %v112, %v111
  %v122 = vpack.c.b16 %v114, %v113
  %v147 = vunpack.c.l.b16 %v67
  %v148 = vunpack.c.l.b16 %v68
  %v149 = vunpack.c.l.b16 %v69
  %v150 = vunpack.c.l.b16 %v70
  %v151 = vunpack.c.l.b16 %v71
  %v152 = vunpack.c.l.b16 %v72
  %v153 = vunpack.c.l.b16 %v73
  %v154 = vunpack.c.l.b16 %v74
  %v155 = vunpack.c.l.b16 %v75
  %v156 = vunpack.c.l.b16 %v76
  %v157 = vunpack.c.l.b16 %v77
  %v158 = vunpack.c.l.b16 %v78
  %v159 = vunpack.c.l.b16 %v79
  %v160 = vunpack.c.l.b16 %v80
  %v161 = vunpack.c.l.b16 %v81
  %v162 = vunpack.c.l.b16 %v82
  %v163 = vpack.c.b16 %v148, %v147
  %v164 = vpack.c.b16 %v150, %v149
  %v165 = vpack.c.b16 %v152, %v151
  %v166 = vpack.c.b16 %v154, %v153
  %v167 = vpack.c.b16 %v156, %v155
  %v168 = vpack.c.b16 %v158, %v157
  %v169 = vpack.c.b16 %v160, %v159
  %v170 = vpack.c.b16 %v162, %v161
  %179 = vmatprep.subr.bf16.mxu0 0
  %180 = vmatpush1.bf16.msra.mxu0 %v163
  %181 = vmatprep.subr.bf16.mxu0 0
  %182 = vmatpush1.bf16.msra.mxu0 %v164
  %183 = vmatprep.subr.bf16.mxu0 0
  %184 = vmatpush1.bf16.msra.mxu0 %v165
  %185 = vmatprep.subr.bf16.mxu0 0
  %186 = vmatpush1.bf16.msra.mxu0 %v166
  %187 = vmatprep.subr.bf16.mxu0 0
  %188 = vmatpush1.bf16.msra.mxu0 %v167
  %189 = vmatprep.subr.bf16.mxu0 0
  %190 = vmatpush1.bf16.msra.mxu0 %v168
  %191 = vmatprep.subr.bf16.mxu0 0
  %192 = vmatpush1.bf16.msra.mxu0 %v169
  %193 = vmatprep.subr.bf16.mxu0 0
  %194 = vmatpush1.bf16.msra.mxu0 %v170
  %195 = vmatprep.subr.bf16.mxu0 0
  %196 = vmatpush1.bf16.msra.mxu0 0
  %197 = vmatprep.subr.bf16.mxu0 0
  %198 = vmatpush1.bf16.msra.mxu0 0
  %199 = vmatprep.subr.bf16.mxu0 0
  %200 = vmatpush1.bf16.msra.mxu0 0
  %201 = vmatprep.subr.bf16.mxu0 0
  %202 = vmatpush1.bf16.msra.mxu0 0
  %203 = vmatprep.subr.bf16.mxu0 0
  %204 = vmatpush1.bf16.msra.mxu0 0
  %205 = vmatprep.subr.bf16.mxu0 0
  %206 = vmatpush1.bf16.msra.mxu0 0
  %207 = vmatprep.subr.bf16.mxu0 0
  %208 = vmatpush1.bf16.msra.mxu0 0
  %209 = vmatprep.subr.bf16.mxu0 0
  %210 = vmatpush1.bf16.msra.mxu0 0
  %211 = vmatprep.mubr.bf16.mxu0 0
  %212 = vmatmul.mubr.bf16.gmra.mrb[0].mxu0 %v115
  %v213 = vpop.f32.mrb[0].mxu0
  %v214 = vadd.f32 0.0, %v213
  %v215 = vpop.f32.mrb[0].mxu0
  %v216 = vpop.f32.mrb[0].mxu0
  %v217 = vadd.f32 0.0, %v216
  %v218 = vpop.f32.mrb[0].mxu0
  %219 = vmatprep.mubr.bf16.mxu0 0
  %220 = vmatmul.mubr.bf16.gmra.mrb[0].mxu0 %v116
  %v221 = vpop.f32.mrb[0].mxu0
  %v222 = vadd.f32 0.0, %v221
  %v223 = vpop.f32.mrb[0].mxu0
  %v224 = vpop.f32.mrb[0].mxu0
  %v225 = vadd.f32 0.0, %v224
  %v226 = vpop.f32.mrb[0].mxu0
  %227 = vmatprep.mubr.bf16.mxu0 0
  %228 = vmatmul.mubr.bf16.gmra.mrb[0].mxu0 %v117
  %v229 = vpop.f32.mrb[0].mxu0
  %v230 = vadd.f32 0.0, %v229
  %v231 = vpop.f32.mrb[0].mxu0
  %v232 = vpop.f32.mrb[0].mxu0
  %v233 = vadd.f32 0.0, %v232
  %v234 = vpop.f32.mrb[0].mxu0
  %235 = vmatprep.mubr.bf16.mxu0 0
  %236 = vmatmul.mubr.bf16.gmra.mrb[0].mxu0 %v118
  %v237 = vpop.f32.mrb[0].mxu0
  %v238 = vadd.f32 0.0, %v237
  %v239 = vpop.f32.mrb[0].mxu0
  %v240 = vpop.f32.mrb[0].mxu0
  %v241 = vadd.f32 0.0, %v240
  %v242 = vpop.f32.mrb[0].mxu0
  %243 = vmatprep.mubr.bf16.mxu0 0
  %244 = vmatmul.mubr.bf16.gmra.mrb[0].mxu0 %v119
  %v245 = vpop.f32.mrb[0].mxu0
  %v246 = vadd.f32 0.0, %v245
  %v247 = vpop.f32.mrb[0].mxu0
  %v248 = vpop.f32.mrb[0].mxu0
  %v249 = vadd.f32 0.0, %v248
  %v250 = vpop.f32.mrb[0].mxu0
  %251 = vmatprep.mubr.bf16.mxu0 0
  %252 = vmatmul.mubr.bf16.gmra.mrb[0].mxu0 %v120
  %v253 = vpop.f32.mrb[0].mxu0
  %v254 = vadd.f32 0.0, %v253
  %v255 = vpop.f32.mrb[0].mxu0
  %v256 = vpop.f32.mrb[0].mxu0
  %v257 = vadd.f32 0.0, %v256
  %v258 = vpop.f32.mrb[0].mxu0
  %259 = vmatprep.mubr.bf16.mxu0 0
  %260 = vmatmul.mubr.bf16.gmra.mrb[0].mxu0 %v121
  %v261 = vpop.f32.mrb[0].mxu0
  %v262 = vadd.f32 0.0, %v261
  %v263 = vpop.f32.mrb[0].mxu0
  %v264 = vpop.f32.mrb[0].mxu0
  %v265 = vadd.f32 0.0, %v264
  %v266 = vpop.f32.mrb[0].mxu0
  %267 = vmatprep.mubr.bf16.mxu0 0
  %268 = vmatmul.mubr.bf16.gmra.mrb[0].mxu0 %v122
  %v269 = vpop.f32.mrb[0].mxu0
  %v270 = vadd.f32 0.0, %v269
  %v271 = vpop.f32.mrb[0].mxu0
  %v272 = vpop.f32.mrb[0].mxu0
  %v273 = vadd.f32 0.0, %v272
  %v274 = vpop.f32.mrb[0].mxu0
  %275 = vdwg.mxu0
  %v276 = vadd.f32 %v35, %v214
  %v277 = vadd.f32 %v36, %v217
  %v278 = vadd.f32 %v37, %v222
  %v279 = vadd.f32 %v38, %v225
  %v280 = vadd.f32 %v39, %v230
  %v281 = vadd.f32 %v40, %v233
  %v282 = vadd.f32 %v41, %v238
  %v283 = vadd.f32 %v42, %v241
  %v284 = vadd.f32 %v43, %v246
  %v285 = vadd.f32 %v44, %v249
  %v286 = vadd.f32 %v45, %v254
  %v287 = vadd.f32 %v46, %v257
  %v288 = vadd.f32 %v47, %v262
  %v289 = vadd.f32 %v48, %v265
  %v290 = vadd.f32 %v49, %v270
  %v291 = vadd.f32 %v50, %v273
  %292 = vst [vmem:[#allocation2] sm:$0xff] %v276
  %293 = vst [vmem:[#allocation2 + $0x8] sm:$0xff] %v277
  %294 = vst [vmem:[#allocation2 + $0x10] sm:$0xff] %v278
  %295 = vst [vmem:[#allocation2 + $0x18] sm:$0xff] %v279
  %296 = vst [vmem:[#allocation2 + $0x20] sm:$0xff] %v280
  %297 = vst [vmem:[#allocation2 + $0x28] sm:$0xff] %v281
  %298 = vst [vmem:[#allocation2 + $0x30] sm:$0xff] %v282
  %299 = vst [vmem:[#allocation2 + $0x38] sm:$0xff] %v283
  %300 = vst [vmem:[#allocation2 + $0x40] sm:$0xff] %v284
  %301 = vst [vmem:[#allocation2 + $0x48] sm:$0xff] %v285
  %302 = vst [vmem:[#allocation2 + $0x50] sm:$0xff] %v286
  %303 = vst [vmem:[#allocation2 + $0x58] sm:$0xff] %v287
  %304 = vst [vmem:[#allocation2 + $0x60] sm:$0xff] %v288
  %305 = vst [vmem:[#allocation2 + $0x68] sm:$0xff] %v289
  %306 = vst [vmem:[#allocation2 + $0x70] sm:$0xff] %v290
  %307 = vst [vmem:[#allocation2 + $0x78] sm:$0xff] %v291
  // Predicated region
  $region14: #{_lambda_.6} parent=0 // pred_check
    %p308 = pneg %p15
  $region15: #{_lambda_.6} parent=0 // pred_check_branch
    %310 = sbr.rel (%p308) target = $region17
  $region16: #{_lambda_.6} parent=0 // pred_region
    %v311 = vld [vmem:[#allocation2] sm:$0xff]
    %v312 = vld [vmem:[#allocation2 + $0x8] sm:$0xff]
    %v313 = vld [vmem:[#allocation2 + $0x10] sm:$0xff]
    %v314 = vld [vmem:[#allocation2 + $0x18] sm:$0xff]
    %v315 = vld [vmem:[#allocation2 + $0x20] sm:$0xff]
    %v316 = vld [vmem:[#allocation2 + $0x28] sm:$0xff]
    %v317 = vld [vmem:[#allocation2 + $0x30] sm:$0xff]
    %v318 = vld [vmem:[#allocation2 + $0x38] sm:$0xff]
    %v319 = vld [vmem:[#allocation2 + $0x40] sm:$0xff]
    %v320 = vld [vmem:[#allocation2 + $0x48] sm:$0xff]
    %v321 = vld [vmem:[#allocation2 + $0x50] sm:$0xff]
    %v322 = vld [vmem:[#allocation2 + $0x58] sm:$0xff]
    %v323 = vld [vmem:[#allocation2 + $0x60] sm:$0xff]
    %v324 = vld [vmem:[#allocation2 + $0x68] sm:$0xff]
    %v325 = vld [vmem:[#allocation2 + $0x70] sm:$0xff]
    %v326 = vld [vmem:[#allocation2 + $0x78] sm:$0xff]
    %v327 = vpack.c.bf16 %v312, %v311
    %v328 = vpack.c.bf16 %v314, %v313
    %v329 = vpack.c.bf16 %v316, %v315
    %v330 = vpack.c.bf16 %v318, %v317
    %v331 = vpack.c.bf16 %v320, %v319
    %v332 = vpack.c.bf16 %v322, %v321
    %v333 = vpack.c.bf16 %v324, %v323
    %v334 = vpack.c.bf16 %v326, %v325
    %v343 = vunpack.c.l.b16 %v327
    %v344 = vunpack.c.h.b16 %v327
    %v345 = vunpack.c.l.b16 %v328
    %v346 = vunpack.c.h.b16 %v328
    %v347 = vunpack.c.l.b16 %v329
    %v348 = vunpack.c.h.b16 %v329
    %v349 = vunpack.c.l.b16 %v330
    %v350 = vunpack.c.h.b16 %v330
    %v351 = vunpack.c.l.b16 %v331
    %v352 = vunpack.c.h.b16 %v331
    %v353 = vunpack.c.l.b16 %v332
    %v354 = vunpack.c.h.b16 %v332
    %v355 = vunpack.c.l.b16 %v333
    %v356 = vunpack.c.h.b16 %v333
    %v357 = vunpack.c.l.b16 %v334
    %v358 = vunpack.c.h.b16 %v334
    %v359 = vpack.c.b16 %v343, %v343
    %v360 = vpack.c.b16 %v344, %v344
    %v361 = vpack.c.b16 %v345, %v345
    %v362 = vpack.c.b16 %v346, %v346
    %v363 = vpack.c.b16 %v347, %v347
    %v364 = vpack.c.b16 %v348, %v348
    %v365 = vpack.c.b16 %v349, %v349
    %v366 = vpack.c.b16 %v350, %v350
    %v367 = vpack.c.b16 %v351, %v351
    %v368 = vpack.c.b16 %v352, %v352
    %v369 = vpack.c.b16 %v353, %v353
    %v370 = vpack.c.b16 %v354, %v354
    %v371 = vpack.c.b16 %v355, %v355
    %v372 = vpack.c.b16 %v356, %v356
    %v373 = vpack.c.b16 %v357, %v357
    %v374 = vpack.c.b16 %v358, %v358
    %391 = vst [vmem:[%s2] sm:$0xf] %v359
    %392 = vst [vmem:[%s2 + $0x4] sm:$0xf] %v360
    %393 = vst [vmem:[%s2 + $0x8] sm:$0xf] %v361
    %394 = vst [vmem:[%s2 + $0xc] sm:$0xf] %v362
    %395 = vst [vmem:[%s2 + $0x10] sm:$0xf] %v363
    %396 = vst [vmem:[%s2 + $0x14] sm:$0xf] %v364
    %397 = vst [vmem:[%s2 + $0x18] sm:$0xf] %v365
    %398 = vst [vmem:[%s2 + $0x1c] sm:$0xf] %v366
    %399 = vst [vmem:[%s2 + $0x20] sm:$0xf] %v367
    %400 = vst [vmem:[%s2 + $0x24] sm:$0xf] %v368
    %401 = vst [vmem:[%s2 + $0x28] sm:$0xf] %v369
    %402 = vst [vmem:[%s2 + $0x2c] sm:$0xf] %v370
    %403 = vst [vmem:[%s2 + $0x30] sm:$0xf] %v371
    %404 = vst [vmem:[%s2 + $0x34] sm:$0xf] %v372
    %405 = vst [vmem:[%s2 + $0x38] sm:$0xf] %v373
    %406 = vst [vmem:[%s2 + $0x3c] sm:$0xf] %v374
    %v407 = vadd.f32 %v311, %v312
    %v408 = vadd.f32 %v407, %v313
    %v409 = vadd.f32 %v408, %v314
    %v410 = vadd.f32 %v409, %v315
    %v411 = vadd.f32 %v410, %v316
    %v412 = vadd.f32 %v411, %v317
    %v413 = vadd.f32 %v412, %v318
    %v414 = vadd.f32 %v413, %v319
    %v415 = vadd.f32 %v414, %v320
    %v416 = vadd.f32 %v415, %v321
    %v417 = vadd.f32 %v416, %v322
    %v418 = vadd.f32 %v417, %v323
    %v419 = vadd.f32 %v418, %v324
    %v420 = vadd.f32 %v419, %v325
    %v421 = vadd.f32 %v420, %v326
    %v422 = vrot.slane %v421, 4
    %v423 = vadd.f32 %v421, %v422
    %v424 = vrot.slane %v423, 2
    %v425 = vadd.f32 %v423, %v424
    %v426 = vrot.slane %v425, 1
    %v427 = vadd.f32 %v425, %v426
    %428 = vst [vmem:[%s3] sm:$0x1] %v427
    %v429 = vmul.f32 %v311, %v311
    %v430 = vmul.f32 %v312, %v312
    %v431 = vmul.f32 %v313, %v313
    %v432 = vmul.f32 %v314, %v314
    %v433 = vmul.f32 %v315, %v315
    %v434 = vmul.f32 %v316, %v316
    %v435 = vmul.f32 %v317, %v317
    %v436 = vmul.f32 %v318, %v318
    %v437 = vmul.f32 %v319, %v319
    %v438 = vmul.f32 %v320, %v320
    %v439 = vmul.f32 %v321, %v321
    %v440 = vmul.f32 %v322, %v322
    %v441 = vmul.f32 %v323, %v323
    %v442 = vmul.f32 %v324, %v324
    %v443 = vmul.f32 %v325, %v325
    %v444 = vmul.f32 %v326, %v326
    %v445 = vadd.f32 %v429, %v430
    %v446 = vadd.f32 %v445, %v431
    %v447 = vadd.f32 %v446, %v432
    %v448 = vadd.f32 %v447, %v433
    %v449 = vadd.f32 %v448, %v434
    %v450 = vadd.f32 %v449, %v435
    %v451 = vadd.f32 %v450, %v436
    %v452 = vadd.f32 %v451, %v437
    %v453 = vadd.f32 %v452, %v438
    %v454 = vadd.f32 %v453, %v439
    %v455 = vadd.f32 %v454, %v440
    %v456 = vadd.f32 %v455, %v441
    %v457 = vadd.f32 %v456, %v442
    %v458 = vadd.f32 %v457, %v443
    %v459 = vadd.f32 %v458, %v444
    %v460 = vrot.slane %v459, 4
    %v461 = vadd.f32 %v459, %v460
    %v462 = vrot.slane %v461, 2
    %v463 = vadd.f32 %v461, %v462
    %v464 = vrot.slane %v463, 1
    %v465 = vadd.f32 %v463, %v464
    %466 = vst [vmem:[%s4] sm:$0x1] %v465
  $region17: #{_lambda_.6} parent=0 // pred_fallthru
    _
  // Predicated region
  $region18: #{_lambda_.6} parent=0 // pred_check
    _
  $region19: #{_lambda_.6} parent=0 // pred_check_branch
    %468 = sbr.rel (0) target = $region21
  $region20: #{_lambda_.6} parent=0 // pred_region
    _
  $region21: #{_lambda_.6} parent=0 // pred_fallthru
    _
  // Predicated region
  $region22: #{_lambda_.6} parent=0 // pred_check
    _
  $region23: #{_lambda_.6} parent=0 // pred_check_branch
    %470 = sbr.rel (0) target = $region25
  $region24: #{_lambda_.6} parent=0 // pred_region
    _
  $region25: #{_lambda_.6} parent=0 // pred_fallthru
    _
  // Predicated region
  $region26: #{_lambda_.6} parent=0 // pred_check
    _
  $region27: #{_lambda_.6} parent=0 // pred_check_branch
    %472 = sbr.rel (0) target = $region29
  $region28: #{_lambda_.6} parent=0 // pred_region
    _
  $region29: #{_lambda_.6} parent=0 // pred_fallthru
    _
  // Predicated region
  $region30: #{_lambda_.6} parent=0 // pred_check
    _
  $region31: #{_lambda_.6} parent=0 // pred_check_branch
    %474 = sbr.rel (0) target = $region33
  $region32: #{_lambda_.6} parent=0 // pred_region
    _
  $region33: #{_lambda_.6} parent=0 // pred_fallthru
    _
  // Predicated region
  $region34: #{_lambda_.6} parent=0 // pred_check
    _
  $region35: #{_lambda_.6} parent=0 // pred_check_branch
    %476 = sbr.rel (0) target = $region37
  $region36: #{_lambda_.6} parent=0 // pred_region
    _
  $region37: #{_lambda_.6} parent=0 // pred_fallthru
    _
  // Predicated region
  $region38: #{_lambda_.6} parent=0 // pred_check
    _
  $region39: #{_lambda_.6} parent=0 // pred_check_branch
    %478 = sbr.rel (0) target = $region41
  $region40: #{_lambda_.6} parent=0 // pred_region
    _
  $region41: #{_lambda_.6} parent=0 // pred_fallthru
    _

// kernel: _lambda_.7
$region0: #{_lambda_.7}
  #allocation0 [shape = 'u32[]', space=smem, size = 0x4, offset = 0x4, fixed_abs, tag = 'smem constant byte address 0x4 - core index']
  #allocation1 [shape = 'u32[144,128]{1,0:T(1,128)}', space=vmem, size = 0x12000, scoped, tag = 'internal scratch']
  %s0 = inlined_call_operand.vmem [shape: bf16[128,128], index: 0, kind: input, shape index: {}]
  %s1 = inlined_call_operand.vmem [shape: f32[1,128], index: 1, kind: input, shape index: {}]
  %s2 = inlined_call_operand.vmem [shape: f32[1,128], index: 2, kind: input, shape index: {}]
  %s3 = inlined_call_operand.vmem [shape: bf16[128,256], index: 3, kind: input, shape index: {}]
  %s4 = inlined_call_operand.vmem [shape: f32[1,128], index: 4, kind: input, shape index: {}]
  %s5 = inlined_call_operand.vmem [shape: f32[1,128], index: 5, kind: input, shape index: {}]
  %s6 = inlined_call_operand.vmem [shape: f32[128,128], index: 6, kind: output, shape index: {}]
  %s7 = sld [smem:[#allocation0]]
  $region75: #{_lambda_.7} parent=0
    _
  %s9 = ssub.s32 1, %s7
  %s10 = scalar_select 0, %s9, %s7
  $region1: #{_lambda_.7} parent=0
    #allocation2 [shape = 'u8[32768]{0}', space=vmem, size = 0x8000, scoped, tag = 'input window, operand 3, single buffered']
    // Predicated region
    $region2: #{_lambda_.7} parent=1 // pred_check
      _
    $region3: #{_lambda_.7} parent=1 // pred_check_branch
      %12 = sbr.rel (0) target = $region5
    $region4: #{_lambda_.7} parent=1 // pred_region
      _
    $region5: #{_lambda_.7} parent=1 // pred_fallthru
      _
    // Predicated region
    $region6: #{_lambda_.7} parent=1 // pred_check
      _
    $region7: #{_lambda_.7} parent=1 // pred_check_branch
      %14 = sbr.rel (0) target = $region9
    $region8: #{_lambda_.7} parent=1 // pred_region
      _
    $region9: #{_lambda_.7} parent=1 // pred_fallthru
      _
    // Predicated region
    $region10: #{_lambda_.7} parent=1 // pred_check
      _
    $region11: #{_lambda_.7} parent=1 // pred_check_branch
      %16 = sbr.rel (0) target = $region13
    $region12: #{_lambda_.7} parent=1 // pred_region
      _
    $region13: #{_lambda_.7} parent=1 // pred_fallthru
      _
    // Predicated region
    $region14: #{_lambda_.7} parent=1 // pred_check
      _
    $region15: #{_lambda_.7} parent=1 // pred_check_branch
      %18 = sbr.rel (0) target = $region17
    $region16: #{_lambda_.7} parent=1 // pred_region
      %s19 = scalar_lea.vmem %s3, 4
      // Predicated region
      $region18: #{_lambda_.7} parent=16 // pred_check
        _
      $region19: #{_lambda_.7} parent=16 // pred_check_branch
        %21 = sbr.rel (0) target = $region21
      $region20: #{_lambda_.7} parent=16 // pred_region
        // Predicated region
        $region22: #{_lambda_.7} parent=20 // pred_check
          _
        $region23: #{_lambda_.7} parent=20 // pred_check_branch
          %23 = sbr.rel target = $region25
        $region24: #{_lambda_.7} parent=20 // pred_region
          // Predicated region
          $region37: #{_lambda_.7} parent=24 // pred_check
            _
          $region38: #{_lambda_.7} parent=24 // pred_check_branch
            %68 = sbr.rel (0) target = $region40
          $region39: #{_lambda_.7} parent=24 // pred_region
            loop: start=0, step=1, limit=1
            $region41: #{_lambda_.7} parent=39 // loop_pre_header
              _
            $region42: #{_lambda_.7} parent=39 // loop_header
              %s70 = sphi 0, %s74
              %p71 = scmp.ge.s32.totalorder %s70, 1
              %s75 = sphi %s19, %s19
              %s76 = sphi [#allocation2], [#allocation2]
            $region43: #{_lambda_.7} parent=39 // loop_header_branch
              %73 = sbr.rel (%p71) target = $region47
            $region44: #{_lambda_.7} parent=39 // loop_body
              _
            $region45: #{_lambda_.7} parent=39 // loop_footer
              %s74 = sadd.s32 1, %s70
            $region46: #{_lambda_.7} parent=39 // loop_footer_branch
              %69 = sbr.rel target = $region42
            $region47: #{_lambda_.7} parent=39 // loop_exit
              _
            loop: start=0, step=1, limit=1
            $region48: #{_lambda_.7} parent=39 // loop_pre_header
              _
            $region49: #{_lambda_.7} parent=39 // loop_header
              %s79 = sphi 0, %s83
              %p80 = scmp.ge.s32.totalorder %s79, 1
              %s84 = sphi %s19, %s19
              %s85 = sphi [#allocation2], [#allocation2]
            $region50: #{_lambda_.7} parent=39 // loop_header_branch
              %82 = sbr.rel (%p80) target = $region54
            $region51: #{_lambda_.7} parent=39 // loop_body
              %v86 = vld [vmem:[%s84] sm:$0xf]
              %87 = vst [vmem:[%s85] sm:$0xf] %v86
              %v88 = vld [vmem:[%s84 + $0x8] sm:$0xf]
              %89 = vst [vmem:[%s85 + $0x4] sm:$0xf] %v88
              %v90 = vld [vmem:[%s84 + $0x10] sm:$0xf]
              %91 = vst [vmem:[%s85 + $0x8] sm:$0xf] %v90
              %v92 = vld [vmem:[%s84 + $0x18] sm:$0xf]
              %93 = vst [vmem:[%s85 + $0xc] sm:$0xf] %v92
              %v94 = vld [vmem:[%s84 + $0x20] sm:$0xf]
              %95 = vst [vmem:[%s85 + $0x10] sm:$0xf] %v94
              %v96 = vld [vmem:[%s84 + $0x28] sm:$0xf]
              %97 = vst [vmem:[%s85 + $0x14] sm:$0xf] %v96
              %v98 = vld [vmem:[%s84 + $0x30] sm:$0xf]
              %99 = vst [vmem:[%s85 + $0x18] sm:$0xf] %v98
              %v100 = vld [vmem:[%s84 + $0x38] sm:$0xf]
              %101 = vst [vmem:[%s85 + $0x1c] sm:$0xf] %v100
              %v102 = vld [vmem:[%s84 + $0x40] sm:$0xf]
              %103 = vst [vmem:[%s85 + $0x20] sm:$0xf] %v102
              %v104 = vld [vmem:[%s84 + $0x48] sm:$0xf]
              %105 = vst [vmem:[%s85 + $0x24] sm:$0xf] %v104
              %v106 = vld [vmem:[%s84 + $0x50] sm:$0xf]
              %107 = vst [vmem:[%s85 + $0x28] sm:$0xf] %v106
              %v108 = vld [vmem:[%s84 + $0x58] sm:$0xf]
              %109 = vst [vmem:[%s85 + $0x2c] sm:$0xf] %v108
              %v110 = vld [vmem:[%s84 + $0x60] sm:$0xf]
              %111 = vst [vmem:[%s85 + $0x30] sm:$0xf] %v110
              %v112 = vld [vmem:[%s84 + $0x68] sm:$0xf]
              %113 = vst [vmem:[%s85 + $0x34] sm:$0xf] %v112
              %v114 = vld [vmem:[%s84 + $0x70] sm:$0xf]
              %115 = vst [vmem:[%s85 + $0x38] sm:$0xf] %v114
              %v116 = vld [vmem:[%s84 + $0x78] sm:$0xf]
              %117 = vst [vmem:[%s85 + $0x3c] sm:$0xf] %v116
            $region52: #{_lambda_.7} parent=39 // loop_footer
              %s83 = sadd.s32 1, %s79
            $region53: #{_lambda_.7} parent=39 // loop_footer_branch
              %78 = sbr.rel target = $region49
            $region54: #{_lambda_.7} parent=39 // loop_exit
              _
          $region40: #{_lambda_.7} parent=24 // pred_fallthru
            _
        $region25: #{_lambda_.7} parent=20 // pred_fallthru
          _
        // Predicated region
        $region26: #{_lambda_.7} parent=20 // pred_check
          _
        $region27: #{_lambda_.7} parent=20 // pred_check_branch
          %25 = sbr.rel (0) target = $region29
        $region28: #{_lambda_.7} parent=20 // pred_region
          loop: start=0, step=1, limit=1
          $region30: #{_lambda_.7} parent=28 // loop_pre_header
            _
          $region31: #{_lambda_.7} parent=28 // loop_header
            %s28 = sphi 0, %s32
            %p29 = scmp.ge.s32.totalorder %s28, 1
            %s33 = sphi %s19, %s19
            %s34 = sphi [#allocation2], [#allocation2]
          $region32: #{_lambda_.7} parent=28 // loop_header_branch
            %31 = sbr.rel (%p29) target = $region36
          $region33: #{_lambda_.7} parent=28 // loop_body
            %v35 = vld [vmem:[%s33] sm:$0xf]
            %36 = vst [vmem:[%s34] sm:$0xf] %v35
            %v37 = vld [vmem:[%s33 + $0x8] sm:$0xf]
            %38 = vst [vmem:[%s34 + $0x4] sm:$0xf] %v37
            %v39 = vld [vmem:[%s33 + $0x10] sm:$0xf]
            %40 = vst [vmem:[%s34 + $0x8] sm:$0xf] %v39
            %v41 = vld [vmem:[%s33 + $0x18] sm:$0xf]
            %42 = vst [vmem:[%s34 + $0xc] sm:$0xf] %v41
            %v43 = vld [vmem:[%s33 + $0x20] sm:$0xf]
            %44 = vst [vmem:[%s34 + $0x10] sm:$0xf] %v43
            %v45 = vld [vmem:[%s33 + $0x28] sm:$0xf]
            %46 = vst [vmem:[%s34 + $0x14] sm:$0xf] %v45
            %v47 = vld [vmem:[%s33 + $0x30] sm:$0xf]
            %48 = vst [vmem:[%s34 + $0x18] sm:$0xf] %v47
            %v49 = vld [vmem:[%s33 + $0x38] sm:$0xf]
            %50 = vst [vmem:[%s34 + $0x1c] sm:$0xf] %v49
            %v51 = vld [vmem:[%s33 + $0x40] sm:$0xf]
            %52 = vst [vmem:[%s34 + $0x20] sm:$0xf] %v51
            %v53 = vld [vmem:[%s33 + $0x48] sm:$0xf]
            %54 = vst [vmem:[%s34 + $0x24] sm:$0xf] %v53
            %v55 = vld [vmem:[%s33 + $0x50] sm:$0xf]
            %56 = vst [vmem:[%s34 + $0x28] sm:$0xf] %v55
            %v57 = vld [vmem:[%s33 + $0x58] sm:$0xf]
            %58 = vst [vmem:[%s34 + $0x2c] sm:$0xf] %v57
            %v59 = vld [vmem:[%s33 + $0x60] sm:$0xf]
            %60 = vst [vmem:[%s34 + $0x30] sm:$0xf] %v59
            %v61 = vld [vmem:[%s33 + $0x68] sm:$0xf]
            %62 = vst [vmem:[%s34 + $0x34] sm:$0xf] %v61
            %v63 = vld [vmem:[%s33 + $0x70] sm:$0xf]
            %64 = vst [vmem:[%s34 + $0x38] sm:$0xf] %v63
            %v65 = vld [vmem:[%s33 + $0x78] sm:$0xf]
            %66 = vst [vmem:[%s34 + $0x3c] sm:$0xf] %v65
          $region34: #{_lambda_.7} parent=28 // loop_footer
            %s32 = sadd.s32 1, %s28
          $region35: #{_lambda_.7} parent=28 // loop_footer_branch
            %27 = sbr.rel target = $region31
          $region36: #{_lambda_.7} parent=28 // loop_exit
            _
        $region29: #{_lambda_.7} parent=20 // pred_fallthru
          _
      $region21: #{_lambda_.7} parent=16 // pred_fallthru
        _
      %118 = vnop
    $region17: #{_lambda_.7} parent=1 // pred_fallthru
      _
    // Predicated region
    $region55: #{_lambda_.7} parent=1 // pred_check
      _
    $region56: #{_lambda_.7} parent=1 // pred_check_branch
      %120 = sbr.rel (0) target = $region58
    $region57: #{_lambda_.7} parent=1 // pred_region
      _
    $region58: #{_lambda_.7} parent=1 // pred_fallthru
      _
    // Predicated region
    $region59: #{_lambda_.7} parent=1 // pred_check
      _
    $region60: #{_lambda_.7} parent=1 // pred_check_branch
      %122 = sbr.rel (0) target = $region62
    $region61: #{_lambda_.7} parent=1 // pred_region
      _
    $region62: #{_lambda_.7} parent=1 // pred_fallthru
      _
    // Predicated region
    $region63: #{_lambda_.7} parent=1 // pred_check
      _
    $region64: #{_lambda_.7} parent=1 // pred_check_branch
      %124 = sbr.rel (0) target = $region66
    $region65: #{_lambda_.7} parent=1 // pred_region
      _
    $region66: #{_lambda_.7} parent=1 // pred_fallthru
      _
    %v125 = vld [vmem:[%s0] sm:$0xf]
    %v126 = vld [vmem:[%s0 + $0x4] sm:$0xf]
    %v127 = vld [vmem:[%s0 + $0x8] sm:$0xf]
    %v128 = vld [vmem:[%s0 + $0xc] sm:$0xf]
    %v129 = vld [vmem:[%s0 + $0x10] sm:$0xf]
    %v130 = vld [vmem:[%s0 + $0x14] sm:$0xf]
    %v131 = vld [vmem:[%s0 + $0x18] sm:$0xf]
    %v132 = vld [vmem:[%s0 + $0x1c] sm:$0xf]
    %v133 = vld [vmem:[%s0 + $0x20] sm:$0xf]
    %v134 = vld [vmem:[%s0 + $0x24] sm:$0xf]
    %v135 = vld [vmem:[%s0 + $0x28] sm:$0xf]
    %v136 = vld [vmem:[%s0 + $0x2c] sm:$0xf]
    %v137 = vld [vmem:[%s0 + $0x30] sm:$0xf]
    %v138 = vld [vmem:[%s0 + $0x34] sm:$0xf]
    %v139 = vld [vmem:[%s0 + $0x38] sm:$0xf]
    %v140 = vld [vmem:[%s0 + $0x3c] sm:$0xf]
    %v141 = vunpack.c.l.bf16 %v125
    %v142 = vunpack.c.l.bf16 %v126
    %v143 = vunpack.c.l.bf16 %v127
    %v144 = vunpack.c.l.bf16 %v128
    %v145 = vunpack.c.l.bf16 %v129
    %v146 = vunpack.c.l.bf16 %v130
    %v147 = vunpack.c.l.bf16 %v131
    %v148 = vunpack.c.l.bf16 %v132
    %v149 = vunpack.c.l.bf16 %v133
    %v150 = vunpack.c.l.bf16 %v134
    %v151 = vunpack.c.l.bf16 %v135
    %v152 = vunpack.c.l.bf16 %v136
    %v153 = vunpack.c.l.bf16 %v137
    %v154 = vunpack.c.l.bf16 %v138
    %v155 = vunpack.c.l.bf16 %v139
    %v156 = vunpack.c.l.bf16 %v140
    %v157 = vld [vmem:[%s1] sm:$0x1]
    %v159 = vlaneseq
    %v160 = vshrl.u32 %v159, 7
    %v161 = vsub.s32 0, %v160
    %v162 = vrot.slane %v157, %v161
    %v164 = vmul.f32 %v141, %v162
    %v165 = vmul.f32 %v142, %v162
    %v166 = vmul.f32 %v143, %v162
    %v167 = vmul.f32 %v144, %v162
    %v168 = vmul.f32 %v145, %v162
    %v169 = vmul.f32 %v146, %v162
    %v170 = vmul.f32 %v147, %v162
    %v171 = vmul.f32 %v148, %v162
    %v172 = vmul.f32 %v149, %v162
    %v173 = vmul.f32 %v150, %v162
    %v174 = vmul.f32 %v151, %v162
    %v175 = vmul.f32 %v152, %v162
    %v176 = vmul.f32 %v153, %v162
    %v177 = vmul.f32 %v154, %v162
    %v178 = vmul.f32 %v155, %v162
    %v179 = vmul.f32 %v156, %v162
    %v180 = vld [vmem:[%s2] sm:$0x1]
    %v182 = vlaneseq
    %v183 = vshrl.u32 %v182, 7
    %v184 = vsub.s32 0, %v183
    %v185 = vrot.slane %v180, %v184
    %v187 = vadd.f32 %v164, %v185
    %v188 = vadd.f32 %v165, %v185
    %v189 = vadd.f32 %v166, %v185
    %v190 = vadd.f32 %v167, %v185
    %v191 = vadd.f32 %v168, %v185
    %v192 = vadd.f32 %v169, %v185
    %v193 = vadd.f32 %v170, %v185
    %v194 = vadd.f32 %v171, %v185
    %v195 = vadd.f32 %v172, %v185
    %v196 = vadd.f32 %v173, %v185
    %v197 = vadd.f32 %v174, %v185
    %v198 = vadd.f32 %v175, %v185
    %v199 = vadd.f32 %v176, %v185
    %v200 = vadd.f32 %v177, %v185
    %v201 = vadd.f32 %v178, %v185
    %v202 = vadd.f32 %v179, %v185
    %v203 = vld [vmem:[#allocation2] sm:$0xf]
    %v204 = vld [vmem:[#allocation2 + $0x4] sm:$0xf]
    %v205 = vld [vmem:[#allocation2 + $0x8] sm:$0xf]
    %v206 = vld [vmem:[#allocation2 + $0xc] sm:$0xf]
    %v207 = vld [vmem:[#allocation2 + $0x10] sm:$0xf]
    %v208 = vld [vmem:[#allocation2 + $0x14] sm:$0xf]
    %v209 = vld [vmem:[#allocation2 + $0x18] sm:$0xf]
    %v210 = vld [vmem:[#allocation2 + $0x1c] sm:$0xf]
    %v211 = vld [vmem:[#allocation2 + $0x20] sm:$0xf]
    %v212 = vld [vmem:[#allocation2 + $0x24] sm:$0xf]
    %v213 = vld [vmem:[#allocation2 + $0x28] sm:$0xf]
    %v214 = vld [vmem:[#allocation2 + $0x2c] sm:$0xf]
    %v215 = vld [vmem:[#allocation2 + $0x30] sm:$0xf]
    %v216 = vld [vmem:[#allocation2 + $0x34] sm:$0xf]
    %v217 = vld [vmem:[#allocation2 + $0x38] sm:$0xf]
    %v218 = vld [vmem:[#allocation2 + $0x3c] sm:$0xf]
    %v219 = vunpack.c.l.bf16 %v203
    %v220 = vunpack.c.l.bf16 %v204
    %v221 = vunpack.c.l.bf16 %v205
    %v222 = vunpack.c.l.bf16 %v206
    %v223 = vunpack.c.l.bf16 %v207
    %v224 = vunpack.c.l.bf16 %v208
    %v225 = vunpack.c.l.bf16 %v209
    %v226 = vunpack.c.l.bf16 %v210
    %v227 = vunpack.c.l.bf16 %v211
    %v228 = vunpack.c.l.bf16 %v212
    %v229 = vunpack.c.l.bf16 %v213
    %v230 = vunpack.c.l.bf16 %v214
    %v231 = vunpack.c.l.bf16 %v215
    %v232 = vunpack.c.l.bf16 %v216
    %v233 = vunpack.c.l.bf16 %v217
    %v234 = vunpack.c.l.bf16 %v218
    %v235 = vld [vmem:[%s4] sm:$0x1]
    %v237 = vlaneseq
    %v238 = vshrl.u32 %v237, 7
    %v239 = vsub.s32 0, %v238
    %v240 = vrot.slane %v235, %v239
    %v242 = vmul.f32 %v219, %v240
    %v243 = vmul.f32 %v220, %v240
    %v244 = vmul.f32 %v221, %v240
    %v245 = vmul.f32 %v222, %v240
    %v246 = vmul.f32 %v223, %v240
    %v247 = vmul.f32 %v224, %v240
    %v248 = vmul.f32 %v225, %v240
    %v249 = vmul.f32 %v226, %v240
    %v250 = vmul.f32 %v227, %v240
    %v251 = vmul.f32 %v228, %v240
    %v252 = vmul.f32 %v229, %v240
    %v253 = vmul.f32 %v230, %v240
    %v254 = vmul.f32 %v231, %v240
    %v255 = vmul.f32 %v232, %v240
    %v256 = vmul.f32 %v233, %v240
    %v257 = vmul.f32 %v234, %v240
    %v258 = vld [vmem:[%s5] sm:$0x1]
    %v260 = vlaneseq
    %v261 = vshrl.u32 %v260, 7
    %v262 = vsub.s32 0, %v261
    %v263 = vrot.slane %v258, %v262
    %v265 = vadd.f32 %v242, %v263
    %v266 = vadd.f32 %v243, %v263
    %v267 = vadd.f32 %v244, %v263
    %v268 = vadd.f32 %v245, %v263
    %v269 = vadd.f32 %v246, %v263
    %v270 = vadd.f32 %v247, %v263
    %v271 = vadd.f32 %v248, %v263
    %v272 = vadd.f32 %v249, %v263
    %v273 = vadd.f32 %v250, %v263
    %v274 = vadd.f32 %v251, %v263
    %v275 = vadd.f32 %v252, %v263
    %v276 = vadd.f32 %v253, %v263
    %v277 = vadd.f32 %v254, %v263
    %v278 = vadd.f32 %v255, %v263
    %v279 = vadd.f32 %v256, %v263
    %v280 = vadd.f32 %v257, %v263
    %v281 = vadd.f32 %v187, %v265
    %v282 = vadd.f32 %v188, %v266
    %v283 = vadd.f32 %v189, %v267
    %v284 = vadd.f32 %v190, %v268
    %v285 = vadd.f32 %v191, %v269
    %v286 = vadd.f32 %v192, %v270
    %v287 = vadd.f32 %v193, %v271
    %v288 = vadd.f32 %v194, %v272
    %v289 = vadd.f32 %v195, %v273
    %v290 = vadd.f32 %v196, %v274
    %v291 = vadd.f32 %v197, %v275
    %v292 = vadd.f32 %v198, %v276
    %v293 = vadd.f32 %v199, %v277
    %v294 = vadd.f32 %v200, %v278
    %v295 = vadd.f32 %v201, %v279
    %v296 = vadd.f32 %v202, %v280
    %v297 = vmax.f32 %v281, 0.0
    %v298 = vmax.f32 %v282, 0.0
    %v299 = vmax.f32 %v283, 0.0
    %v300 = vmax.f32 %v284, 0.0
    %v301 = vmax.f32 %v285, 0.0
    %v302 = vmax.f32 %v286, 0.0
    %v303 = vmax.f32 %v287, 0.0
    %v304 = vmax.f32 %v288, 0.0
    %v305 = vmax.f32 %v289, 0.0
    %v306 = vmax.f32 %v290, 0.0
    %v307 = vmax.f32 %v291, 0.0
    %v308 = vmax.f32 %v292, 0.0
    %v309 = vmax.f32 %v293, 0.0
    %v310 = vmax.f32 %v294, 0.0
    %v311 = vmax.f32 %v295, 0.0
    %v312 = vmax.f32 %v296, 0.0
    %313 = vst [vmem:[%s6] sm:$0xff] %v297
    %314 = vst [vmem:[%s6 + $0x8] sm:$0xff] %v298
    %315 = vst [vmem:[%s6 + $0x10] sm:$0xff] %v299
    %316 = vst [vmem:[%s6 + $0x18] sm:$0xff] %v300
    %317 = vst [vmem:[%s6 + $0x20] sm:$0xff] %v301
    %318 = vst [vmem:[%s6 + $0x28] sm:$0xff] %v302
    %319 = vst [vmem:[%s6 + $0x30] sm:$0xff] %v303
    %320 = vst [vmem:[%s6 + $0x38] sm:$0xff] %v304
    %321 = vst [vmem:[%s6 + $0x40] sm:$0xff] %v305
    %322 = vst [vmem:[%s6 + $0x48] sm:$0xff] %v306
    %323 = vst [vmem:[%s6 + $0x50] sm:$0xff] %v307
    %324 = vst [vmem:[%s6 + $0x58] sm:$0xff] %v308
    %325 = vst [vmem:[%s6 + $0x60] sm:$0xff] %v309
    %326 = vst [vmem:[%s6 + $0x68] sm:$0xff] %v310
    %327 = vst [vmem:[%s6 + $0x70] sm:$0xff] %v311
    %328 = vst [vmem:[%s6 + $0x78] sm:$0xff] %v312
    // Predicated region
    $region67: #{_lambda_.7} parent=1 // pred_check
      _
    $region68: #{_lambda_.7} parent=1 // pred_check_branch
      %330 = sbr.rel (0) target = $region70
    $region69: #{_lambda_.7} parent=1 // pred_region
      _
    $region70: #{_lambda_.7} parent=1 // pred_fallthru
      _
    // Predicated region
    $region71: #{_lambda_.7} parent=1 // pred_check
      _
    $region72: #{_lambda_.7} parent=1 // pred_check_branch
      %332 = sbr.rel (0) target = $region74
    $region73: #{_lambda_.7} parent=1 // pred_region
      _
    $region74: #{_lambda_.7} parent=1 // pred_fallthru
      _

</llo_original>
